<compile_context>
chip_gen: v6e
topology: v6e:2x2x1
jax: 0.10.0
libtpu: 0.0.40
codegen_flags: <defaults>
</compile_context>

<pallas_src>
import functools

import jax
import jax.numpy as jnp
from jax.experimental import pallas as pl
from jax.experimental.pallas import tpu as pltpu


_VMEM_LIMIT = 48 * 1024 * 1024  # below v7x's 64 MiB physical, above defaults


# ----------------------------------------------------------------------------
# In-kernel math helpers (Python-float constants only -> jaxpr literals)
# ----------------------------------------------------------------------------
def _erf_f32(x):
    # Eigen / XLA fast f32 erf (odd/even rational polynomial), |err| ~ 1e-6.
    x = jnp.clip(x, -3.832506856, 3.832506856)
    x2 = x * x
    p = -2.72614225801306e-10
    p = p * x2 + 2.77068142495902e-08
    p = p * x2 + -2.10102402082508e-06
    p = p * x2 + -5.69250639462346e-05
    p = p * x2 + -7.34990630326855e-04
    p = p * x2 + -2.95459980854025e-03
    p = p * x2 + -1.60960333262415e-02
    p = p * x
    q = -1.45660718464996e-05
    q = q * x2 + -2.13374055278905e-04
    q = q * x2 + -1.68282697438203e-03
    q = q * x2 + -7.37332916720468e-03
    q = q * x2 + -1.42647390514189e-02
    # EUP reciprocal instead of VALU divide (q is bounded away from 0).
    return p * pl.reciprocal(q, approx=True)


def _gelu_exact(x):
    # Matches torch.nn.GELU() (erf form).
    return 0.5 * x * (1.0 + _erf_f32(x * 0.7071067811865476))


def _round_up(v, m):
    return ((v + m - 1) // m) * m


def _choose_tile(size, pref, quantum):
    """Pick (tile, padded_size) for one dim.

    Prefers the full dim when small, else the largest divisor of `size` that
    is a multiple of `quantum` and <= pref (no padded/zero work); falls back
    to padding only when no such divisor exists.
    """
    if size <= pref:
        return size, size
    t = (pref // quantum) * quantum
    while t >= quantum:
        if size % t == 0:
            return t, size
        t -= quantum
    return pref, _round_up(size, pref)


# ----------------------------------------------------------------------------
# Fused (LayerNorm?) -> matmul -> (+bias) -> (GELU?) -> (+residual) kernel
# ----------------------------------------------------------------------------
def _linear_kernel(*refs, has_ln, has_bias, has_res, gelu, eps, use_acc):
    idx = 0
    x_ref = refs[idx]; idx += 1
    w_ref = refs[idx]; idx += 1
    g_ref = bt_ref = b_ref = r_ref = None
    if has_ln:
        g_ref, bt_ref = refs[idx], refs[idx + 1]
        idx += 2
    if has_bias:
        b_ref = refs[idx]; idx += 1
    if has_res:
        r_ref = refs[idx]; idx += 1
    o_ref = refs[idx]; idx += 1
    if use_acc:
        acc_ref = refs[idx]; idx += 1
    else:
        acc_ref = o_ref                      # f32 output doubles as accumulator
    ln_ref = refs[idx] if has_ln else None

    k = pl.program_id(2)
    nk = pl.num_programs(2)

    @pl.when(k == 0)
    def _init():
        acc_ref[...] = jnp.zeros_like(acc_ref)

    if has_ln:
        # LayerNorm prologue over the full feature row (tk == K enforced, so
        # nk == 1).  Computed once per row block (j == 0) into a VMEM cache
        # and reused for every N tile; j axis is "arbitrary" so the cache is
        # always initialized before use on each core.
        j = pl.program_id(1)

        @pl.when(j == 0)
        def _ln():
            x = x_ref[...].astype(jnp.float32)
            mu = jnp.mean(x, axis=-1, keepdims=True)
            xc = x - mu
            var = jnp.mean(xc * xc, axis=-1, keepdims=True)
            xn = (xc * jax.lax.rsqrt(var + eps)) * g_ref[...] + bt_ref[...]
            ln_ref[...] = xn.astype(jnp.bfloat16)

        x = ln_ref[...]
    else:
        x = x_ref[...]
        if x_ref.dtype != jnp.bfloat16:
            x = x.astype(jnp.bfloat16)

    w = w_ref[...]
    if w_ref.dtype != jnp.bfloat16:
        w = w.astype(jnp.bfloat16)

    # bf16 MXU feeds, f32 accumulation.
    acc_ref[...] += jnp.dot(x, w, preferred_element_type=jnp.float32)

    @pl.when(k == nk - 1)
    def _epilogue():
        y = acc_ref[...]
        if has_bias:
            y = y + b_ref[...]
        if gelu:
            y = _gelu_exact(y)
        if has_res:
            y = y + r_ref[...]
        o_ref[...] = y.astype(o_ref.dtype)


def pallas_linear(x, w, b=None, residual=None, gelu=False,
                  ln_gamma=None, ln_beta=None, eps=1e-5,
                  out_dtype=jnp.float32,
                  tm_pref=512, tn_pref=512, tk_pref=512):
    """y = [gelu]( LN?(x) @ w + b ) [+ residual].   x:(M,K)  w:(K,N)."""
    M, K = x.shape
    K2, N = w.shape
    assert K == K2
    has_ln = ln_gamma is not None
    has_bias = b is not None
    has_res = residual is not None
    out_dtype = jnp.dtype(out_dtype)
    use_acc = out_dtype != jnp.dtype(jnp.float32)

    tm, Mp = _choose_tile(M, tm_pref, 8)
    tn, Np = _choose_tile(N, tn_pref, 128)
    if has_ln:
        tk, Kp = K, K              # LN needs the whole feature row in one tile
    else:
        tk, Kp = _choose_tile(K, tk_pref, 128)

    xp = x if (Mp == M and Kp == K) else jnp.pad(x, ((0, Mp - M), (0, Kp - K)))
    wp = w if (Kp == K and Np == N) else jnp.pad(w, ((0, Kp - K), (0, Np - N)))

    inputs = [xp, wp]
    in_specs = [
        pl.BlockSpec((tm, tk), lambda i, j, k: (i, k)),
        pl.BlockSpec((tk, tn), lambda i, j, k: (k, j)),
    ]
    if has_ln:
        inputs += [ln_gamma.reshape(1, K).astype(jnp.float32),
                   ln_beta.reshape(1, K).astype(jnp.float32)]
        in_specs += [pl.BlockSpec((1, tk), lambda i, j, k: (0, k)),
                     pl.BlockSpec((1, tk), lambda i, j, k: (0, k))]
    if has_bias:
        bp = b.reshape(1, N).astype(jnp.float32)
        if Np != N:
            bp = jnp.pad(bp, ((0, 0), (0, Np - N)))
        inputs.append(bp)
        in_specs.append(pl.BlockSpec((1, tn), lambda i, j, k: (0, j)))
    if has_res:
        rp = residual
        if Mp != M or Np != N:
            rp = jnp.pad(rp, ((0, Mp - M), (0, Np - N)))
        inputs.append(rp)
        in_specs.append(pl.BlockSpec((tm, tn), lambda i, j, k: (i, j)))

    scratch = []
    if use_acc:
        scratch.append(pltpu.VMEM((tm, tn), jnp.float32))
    if has_ln:
        scratch.append(pltpu.VMEM((tm, tk), jnp.bfloat16))

    kernel = functools.partial(
        _linear_kernel, has_ln=has_ln, has_bias=has_bias, has_res=has_res,
        gelu=gelu, eps=float(eps), use_acc=use_acc)

    out = pl.pallas_call(
        kernel,
        out_shape=jax.ShapeDtypeStruct((Mp, Np), out_dtype),
        grid_spec=pltpu.PrefetchScalarGridSpec(
            num_scalar_prefetch=0,
            grid=(Mp // tm, Np // tn, Kp // tk),
            in_specs=in_specs,
            out_specs=pl.BlockSpec((tm, tn), lambda i, j, k: (i, j)),
            scratch_shapes=scratch),
        compiler_params=pltpu.CompilerParams(
            dimension_semantics=("parallel",
                                 "arbitrary" if has_ln else "parallel",
                                 "arbitrary"),
            vmem_limit_bytes=_VMEM_LIMIT),
    )(*inputs)

    if Mp != M or Np != N:
        out = out[:M, :N]
    return out


# ----------------------------------------------------------------------------
# Attention: softmax(q k^T / sqrt(d)) v, fused with the output projection
# (w_out, b_out) and the residual add.  Grid = (batch, query tiles), both
# parallel.  Padded keys are masked; the residual stream output stays f32.
# ----------------------------------------------------------------------------
def _attention_kernel(*refs, heads, dim_head, t_valid, scale, separate_q):
    idx = 0
    if separate_q:
        q_ref = refs[idx]; idx += 1
    kv_ref = refs[idx]; idx += 1
    w_ref = refs[idx]; idx += 1
    b_ref = refs[idx]; idx += 1
    res_ref = refs[idx]; idx += 1
    o_ref = refs[idx]

    kv = kv_ref[0]                              # (T_pad, 3*inner) bf16
    qrows = q_ref[0] if separate_q else kv      # (tq,    3*inner) bf16
    tq = qrows.shape[0]
    T_pad = kv.shape[0]
    inner = heads * dim_head

    if t_valid < T_pad:
        key_idx = jax.lax.broadcasted_iota(jnp.int32, (tq, T_pad), 1)
        valid = key_idx < t_valid

    # Start the accumulator with bias + residual; add each head's projected
    # context into it (no per-head outs list, no concatenate, no extra HBM
    # round-trip for the attention activation).
    y = res_ref[0] + b_ref[...]                 # (tq, dim) f32

    for h in range(heads):
        lo = h * dim_head
        qh = qrows[:, lo:lo + dim_head]
        kh = kv[:, inner + lo:inner + lo + dim_head]
        vh = kv[:, 2 * inner + lo:2 * inner + lo + dim_head]

        dots = jax.lax.dot_general(
            qh, kh, (((1,), (1,)), ((), ())),
            preferred_element_type=jnp.float32) * scale       # (tq, T_pad)
        if t_valid < T_pad:
            dots = jnp.where(valid, dots, -1e30)
        m = jnp.max(dots, axis=-1, keepdims=True)
        e = jnp.exp(dots - m)
        s = jnp.sum(e, axis=-1, keepdims=True)
        attn = (e * pl.reciprocal(s, approx=True)).astype(jnp.bfloat16)

        ctx = jnp.dot(attn, vh, preferred_element_type=jnp.float32)
        w_h = w_ref[lo:lo + dim_head, :]                       # (dim_head, dim)
        y = y + jnp.dot(ctx.astype(jnp.bfloat16), w_h,
                        preferred_element_type=jnp.float32)

    o_ref[0] = y.astype(o_ref.dtype)


def pallas_attention(qkv, w_out, b_out, residual, *, heads, dim_head,
                     t_valid, scale):
    """qkv: (B, T_pad, 3*inner) bf16 -> new residual stream (B, T_pad, dim) f32."""
    B, T_pad, three_inner = qkv.shape
    inner = heads * dim_head
    dim = w_out.shape[-1]

    tq = 128 if (T_pad > 128 and T_pad % 128 == 0) else T_pad
    nq = T_pad // tq
    separate_q = nq > 1                    # avoid duplicate qkv DMA when nq==1

    kernel = functools.partial(
        _attention_kernel, heads=heads, dim_head=dim_head,
        t_valid=int(t_valid), scale=float(scale), separate_q=separate_q)

    b2 = b_out.reshape(1, dim).astype(jnp.float32)

    inputs, in_specs = [], []
    if separate_q:
        inputs.append(qkv)
        in_specs.append(
            pl.BlockSpec((1, tq, three_inner), lambda b, qi: (b, qi, 0)))
    inputs.append(qkv)
    in_specs.append(
        pl.BlockSpec((1, T_pad, three_inner), lambda b, qi: (b, 0, 0)))
    inputs += [w_out, b2, residual]
    in_specs += [
        pl.BlockSpec((inner, dim), lambda b, qi: (0, 0)),
        pl.BlockSpec((1, dim), lambda b, qi: (0, 0)),
        pl.BlockSpec((1, tq, dim), lambda b, qi: (b, qi, 0)),
    ]

    return pl.pallas_call(
        kernel,
        out_shape=jax.ShapeDtypeStruct((B, T_pad, dim), jnp.float32),
        grid=(B, nq),
        in_specs=in_specs,
        out_specs=pl.BlockSpec((1, tq, dim), lambda b, qi: (b, qi, 0)),
        compiler_params=pltpu.CompilerParams(
            dimension_semantics=("parallel", "parallel"),
            vmem_limit_bytes=_VMEM_LIMIT),
    )(*inputs)


# ----------------------------------------------------------------------------
# Parameter initialization (deterministic, synthetic).  Matmul weights are
# stored pre-cast to bf16 in HBM (halves weight DMA); biases / LN / embeddings
# stay f32.
# ----------------------------------------------------------------------------
def init_vit_params(key, *, image_size, patch_size, channels, dim, depth,
                    heads, dim_head, mlp_dim):
    num_patches = (image_size // patch_size) ** 2
    patch_dim = channels * patch_size * patch_size
    inner_dim = heads * dim_head

    def normal(k, shape, s=0.02):
        return jax.random.normal(k, shape, dtype=jnp.float32) * s

    def wnormal(k, shape, s=0.02):
        return normal(k, shape, s).astype(jnp.bfloat16)

    keys = jax.random.split(key, 4 + depth)
    params = {
        "patch_w": wnormal(keys[0], (patch_dim, dim)),
        "patch_b": jnp.zeros((dim,), jnp.float32),
        "pos_emb": jax.random.normal(keys[1], (1, num_patches + 1, dim),
                                     jnp.float32),
        "cls_token": jax.random.normal(keys[2], (1, 1, dim), jnp.float32),
        "layers": [],
    }
    for l in range(depth):
        lk = jax.random.split(keys[4 + l], 8)
        params["layers"].append({
            "ln1_g": jnp.ones((dim,), jnp.float32),
            "ln1_b": jnp.zeros((dim,), jnp.float32),
            "w_qkv": wnormal(lk[0], (dim, 3 * inner_dim)),          # no bias
            "w_out": wnormal(lk[1], (inner_dim, dim)),
            "b_out": normal(lk[2], (dim,)),
            "ln2_g": jnp.ones((dim,), jnp.float32),
            "ln2_b": jnp.zeros((dim,), jnp.float32),
            "w_ff1": wnormal(lk[3], (dim, mlp_dim)),
            "b_ff1": normal(lk[4], (mlp_dim,)),
            "w_ff2": wnormal(lk[5], (mlp_dim, dim)),
            "b_ff2": normal(lk[6], (dim,)),
        })
    return params


# ----------------------------------------------------------------------------
# ViTBase forward
# ----------------------------------------------------------------------------
def vit_forward(params, img, *, patch_size, heads, dim_head, pool="cls"):
    B, C, H, W = img.shape
    p = patch_size
    hh, ww = H // p, W // p
    n = hh * ww
    dim = params["patch_w"].shape[1]

    # --- patch embedding: 'b c (h p1) (w p2) -> b (h w) (p1 p2 c)' + Linear ---
    # TODO(synk): patch_embedding_cls is an injected dependency in the original
    # module; the canonical vit-pytorch patch embedding is implemented here.
    x = img.reshape(B, C, hh, p, ww, p)
    x = jnp.transpose(x, (0, 2, 4, 3, 5, 1))            # b h w p1 p2 c
    x = x.reshape(B * n, p * p * C)
    x = pallas_linear(x, params["patch_w"], params["patch_b"])
    x = x.reshape(B, n, dim)

    # --- cls token + positional embedding (emb_dropout = 0 -> identity) ---
    cls_tokens = jnp.broadcast_to(params["cls_token"], (B, 1, dim))
    x = jnp.concatenate([cls_tokens, x], axis=1)         # (B, n+1, dim)
    x = x + params["pos_emb"][:, : n + 1]

    # Pad tokens: lane-dense (multiple of 128) if cheap enough, else mult of 8.
    T = n + 1
    t8, t128 = _round_up(T, 8), _round_up(T, 128)
    T_pad = t128 if t128 <= int(t8 * 1.3) else t8
    if T_pad != T:
        x = jnp.pad(x, ((0, 0), (0, T_pad - T), (0, 0)))

    scale = float(dim_head) ** -0.5
    x2d = x.reshape(B * T_pad, dim)
    intermediates = []

    for layer in params["layers"]:
        # ---- PreNorm + Attention + out-proj + residual ----
        # (LN fused into the qkv matmul; w_out/b_out/residual fused into the
        #  attention kernel -> the attention activation never hits HBM.)
        qkv = pallas_linear(x2d, layer["w_qkv"],
                            ln_gamma=layer["ln1_g"], ln_beta=layer["ln1_b"],
                            out_dtype=jnp.bfloat16)
        x3 = pallas_attention(
            qkv.reshape(B, T_pad, -1), layer["w_out"], layer["b_out"],
            x2d.reshape(B, T_pad, dim),
            heads=heads, dim_head=dim_head, t_valid=T, scale=scale)
        x2d = x3.reshape(B * T_pad, dim)

        # ---- PreNorm + FeedForward + residual (LN fused into ff1 matmul) ----
        h1 = pallas_linear(x2d, layer["w_ff1"], layer["b_ff1"], gelu=True,
                           ln_gamma=layer["ln2_g"], ln_beta=layer["ln2_b"],
                           out_dtype=jnp.bfloat16)
        x2d = pallas_linear(h1, layer["w_ff2"], layer["b_ff2"], residual=x2d)

        intermediates.append(x2d.reshape(B, T_pad, dim)[:, :T])

    x = intermediates[-1]
    if pool == "mean":
        pooled = jnp.mean(x, axis=1)
    elif pool == "cls":
        pooled = x[:, 0]
    else:  # pool is None
        pooled = x
    return pooled, intermediates


# ----------------------------------------------------------------------------
# Demo
# ----------------------------------------------------------------------------
if __name__ == "__main__":
    image_size = 16
    patch_size = 8
    channels = 4
    dim = 32
    depth = 2
    heads = 4
    dim_head = 8
    mlp_dim = 64
    batch = 2

    root = jax.random.PRNGKey(0)
    k_params, k_img = jax.random.split(root)

    params = init_vit_params(
        k_params,
        image_size=image_size, patch_size=patch_size, channels=channels,
        dim=dim, depth=depth, heads=heads, dim_head=dim_head, mlp_dim=mlp_dim,
    )
    img = jax.random.normal(k_img, (batch, channels, image_size, image_size),
                            dtype=jnp.float32)

    fwd = jax.jit(functools.partial(
        vit_forward, patch_size=patch_size, heads=heads, dim_head=dim_head,
        pool="cls"))
    pooled, intermediates = fwd(params, img)
    jax.block_until_ready(pooled)
    jax.block_until_ready(intermediates)

    num_patches = (image_size // patch_size) ** 2
    assert pooled.shape == (batch, dim)
    assert len(intermediates) == depth
    assert intermediates[0].shape == (batch, num_patches + 1, dim)
    assert bool(jnp.all(jnp.isfinite(pooled)))
    print("KERNEL_OK")
</pallas_src>

<mosaic_0001>
module attributes {stable_mosaic.version = 11 : i64} {
  func.func @_linear_kernel(%arg0: i32, %arg1: i32, %arg2: i32, %arg3: memref<8x256xf32, #tpu.memory_space<vmem>>, %arg4: memref<256x32xbf16, #tpu.memory_space<vmem>>, %arg5: memref<1x32xf32, #tpu.memory_space<vmem>>, %arg6: memref<8x32xf32, #tpu.memory_space<vmem>>) attributes {dimension_semantics = [#tpu.dimension_semantics<parallel>, #tpu.dimension_semantics<parallel>, #tpu.dimension_semantics<arbitrary>], iteration_bounds = array<i64: 1, 1, 1>, scalar_prefetch = 0 : i64, scratch_operands = 0 : i64, tpu.core_type = #tpu.core_type<tc>, window_params = [{transform_indices = @transform_0, window_bounds = array<i64: 8, 256>}, {transform_indices = @transform_1, window_bounds = array<i64: 256, 32>}, {transform_indices = @transform_2, window_bounds = array<i64: 1, 32>}, {transform_indices = @transform_3, window_bounds = array<i64: 8, 32>}]} {
    %c0_i32 = arith.constant 0 : i32
    %0 = arith.cmpi eq, %arg2, %c0_i32 : i32
    %1 = arith.extui %0 : i1 to i32
    %c0_i32_0 = arith.constant 0 : i32
    %2 = arith.cmpi ne, %1, %c0_i32_0 : i32
    scf.if %2 {
      %cst_10 = arith.constant 0.000000e+00 : f32
      %13 = vector.broadcast %cst_10 : f32 to vector<8x32xf32>
      %c0_11 = arith.constant 0 : index
      %c0_12 = arith.constant 0 : index
      %14 = vector.load %arg6[%c0_11, %c0_12] : memref<8x32xf32, #tpu.memory_space<vmem>>, vector<8x32xf32>
      tpu.vector_store %arg6[%c0_11, %c0_12], %13 {strides = array<i32>} : memref<8x32xf32, #tpu.memory_space<vmem>>, vector<8x32xf32>,
    } else {
    }
    %c0 = arith.constant 0 : index
    %c0_1 = arith.constant 0 : index
    %3 = vector.load %arg3[%c0, %c0_1] : memref<8x256xf32, #tpu.memory_space<vmem>>, vector<8x256xf32>
    %4 = arith.truncf %3 : vector<8x256xf32> to vector<8x256xbf16>
    %c0_2 = arith.constant 0 : index
    %c0_3 = arith.constant 0 : index
    %5 = vector.load %arg4[%c0_2, %c0_3] : memref<256x32xbf16, #tpu.memory_space<vmem>>, vector<256x32xbf16>
    %c0_4 = arith.constant 0 : index
    %c0_5 = arith.constant 0 : index
    %6 = vector.load %arg6[%c0_4, %c0_5] : memref<8x32xf32, #tpu.memory_space<vmem>>, vector<8x32xf32>
    %cst = arith.constant dense<0.000000e+00> : vector<8x32xf32>
    %7 = tpu.matmul %4, %5, %cst {dimension_numbers = #tpu.dot_dimension_numbers<[1], [0], [0], [1], [0, 0, 1, 1], [], []>} : vector<8x256xbf16>, vector<256x32xbf16>, vector<8x32xf32> -> vector<8x32xf32>
    %8 = arith.addf %6, %7 : vector<8x32xf32>
    %c0_6 = arith.constant 0 : index
    %c0_7 = arith.constant 0 : index
    %9 = vector.load %arg6[%c0_6, %c0_7] : memref<8x32xf32, #tpu.memory_space<vmem>>, vector<8x32xf32>
    tpu.vector_store %arg6[%c0_6, %c0_7], %8 {strides = array<i32>} : memref<8x32xf32, #tpu.memory_space<vmem>>, vector<8x32xf32>,
    %c0_i32_8 = arith.constant 0 : i32
    %10 = arith.cmpi eq, %arg2, %c0_i32_8 : i32
    %11 = arith.extui %10 : i1 to i32
    %c0_i32_9 = arith.constant 0 : i32
    %12 = arith.cmpi ne, %11, %c0_i32_9 : i32
    scf.if %12 {
      %c0_10 = arith.constant 0 : index
      %c0_11 = arith.constant 0 : index
      %13 = vector.load %arg6[%c0_10, %c0_11] : memref<8x32xf32, #tpu.memory_space<vmem>>, vector<8x32xf32>
      %c0_12 = arith.constant 0 : index
      %c0_13 = arith.constant 0 : index
      %14 = vector.load %arg5[%c0_12, %c0_13] : memref<1x32xf32, #tpu.memory_space<vmem>>, vector<1x32xf32>
      %15 = vector.broadcast %14 : vector<1x32xf32> to vector<8x32xf32>
      %16 = arith.addf %13, %15 : vector<8x32xf32>
      %c0_14 = arith.constant 0 : index
      %c0_15 = arith.constant 0 : index
      %17 = vector.load %arg6[%c0_14, %c0_15] : memref<8x32xf32, #tpu.memory_space<vmem>>, vector<8x32xf32>
      tpu.vector_store %arg6[%c0_14, %c0_15], %16 {strides = array<i32>} : memref<8x32xf32, #tpu.memory_space<vmem>>, vector<8x32xf32>,
    } else {
    }
    return
  }
  func.func @transform_0(%arg0: i32, %arg1: i32, %arg2: i32) -> (i32, i32) {
    %c0_i32 = arith.constant 0 : i32
    return %arg0, %arg2 : i32, i32
  }
  func.func @transform_1(%arg0: i32, %arg1: i32, %arg2: i32) -> (i32, i32) {
    %c0_i32 = arith.constant 0 : i32
    return %arg2, %arg1 : i32, i32
  }
  func.func @transform_2(%arg0: i32, %arg1: i32, %arg2: i32) -> (i32, i32) {
    %c0_i32 = arith.constant 0 : i32
    %c0_i32_0 = arith.constant 0 : i32
    return %c0_i32, %arg1 : i32, i32
  }
  func.func @transform_3(%arg0: i32, %arg1: i32, %arg2: i32) -> (i32, i32) {
    %c0_i32 = arith.constant 0 : i32
    return %arg0, %arg1 : i32, i32
  }
}

module attributes {stable_mosaic.version = 11 : i64} {
  func.func @_linear_kernel(%arg0: i32, %arg1: i32, %arg2: i32, %arg3: memref<16x32xf32, #tpu.memory_space<vmem>>, %arg4: memref<32x96xbf16, #tpu.memory_space<vmem>>, %arg5: memref<1x32xf32, #tpu.memory_space<vmem>>, %arg6: memref<1x32xf32, #tpu.memory_space<vmem>>, %arg7: memref<16x96xbf16, #tpu.memory_space<vmem>>, %arg8: memref<16x96xf32, #tpu.memory_space<vmem>>, %arg9: memref<16x32xbf16, #tpu.memory_space<vmem>>) attributes {dimension_semantics = [#tpu.dimension_semantics<parallel>, #tpu.dimension_semantics<arbitrary>, #tpu.dimension_semantics<arbitrary>], iteration_bounds = array<i64: 1, 1, 1>, scalar_prefetch = 0 : i64, scratch_operands = 2 : i64, tpu.core_type = #tpu.core_type<tc>, window_params = [{transform_indices = @transform_0, window_bounds = array<i64: 16, 32>}, {transform_indices = @transform_1, window_bounds = array<i64: 32, 96>}, {transform_indices = @transform_2, window_bounds = array<i64: 1, 32>}, {transform_indices = @transform_3, window_bounds = array<i64: 1, 32>}, {transform_indices = @transform_4, window_bounds = array<i64: 16, 96>}]} {
    %c0_i32 = arith.constant 0 : i32
    %0 = arith.cmpi eq, %arg2, %c0_i32 : i32
    %1 = arith.extui %0 : i1 to i32
    %c0_i32_0 = arith.constant 0 : i32
    %2 = arith.cmpi ne, %1, %c0_i32_0 : i32
    scf.if %2 {
      %cst_12 = arith.constant 0.000000e+00 : f32
      %15 = vector.broadcast %cst_12 : f32 to vector<16x96xf32>
      %c0_13 = arith.constant 0 : index
      %c0_14 = arith.constant 0 : index
      %16 = vector.load %arg8[%c0_13, %c0_14] : memref<16x96xf32, #tpu.memory_space<vmem>>, vector<16x96xf32>
      tpu.vector_store %arg8[%c0_13, %c0_14], %15 {strides = array<i32>} : memref<16x96xf32, #tpu.memory_space<vmem>>, vector<16x96xf32>,
    } else {
    }
    %c0_i32_1 = arith.constant 0 : i32
    %3 = arith.cmpi eq, %arg1, %c0_i32_1 : i32
    %4 = arith.extui %3 : i1 to i32
    %c0_i32_2 = arith.constant 0 : i32
    %5 = arith.cmpi ne, %4, %c0_i32_2 : i32
    scf.if %5 {
      %c0_12 = arith.constant 0 : index
      %c0_13 = arith.constant 0 : index
      %15 = vector.load %arg3[%c0_12, %c0_13] : memref<16x32xf32, #tpu.memory_space<vmem>>, vector<16x32xf32>
      %cst_14 = arith.constant dense<0.000000e+00> : vector<16xf32>
      %16 = vector.multi_reduction <add>, %15, %cst_14 [1] : vector<16x32xf32> to vector<16xf32>
      %17 = vector.shape_cast %16 : vector<16xf32> to vector<16x1xf32>
      %cst_15 = arith.constant 3.200000e+01 : f32
      %18 = vector.broadcast %cst_15 : f32 to vector<16x1xf32>
      %19 = arith.divf %17, %18 : vector<16x1xf32>
      %20 = vector.broadcast %19 : vector<16x1xf32> to vector<16x32xf32>
      %21 = arith.subf %15, %20 : vector<16x32xf32>
      %22 = arith.mulf %21, %21 : vector<16x32xf32>
      %cst_16 = arith.constant dense<0.000000e+00> : vector<16xf32>
      %23 = vector.multi_reduction <add>, %22, %cst_16 [1] : vector<16x32xf32> to vector<16xf32>
      %24 = vector.shape_cast %23 : vector<16xf32> to vector<16x1xf32>
      %cst_17 = arith.constant 3.200000e+01 : f32
      %25 = vector.broadcast %cst_17 : f32 to vector<16x1xf32>
      %26 = arith.divf %24, %25 : vector<16x1xf32>
      %cst_18 = arith.constant 9.99999974E-6 : f32
      %27 = vector.broadcast %cst_18 : f32 to vector<16x1xf32>
      %28 = arith.addf %26, %27 : vector<16x1xf32>
      %29 = math.rsqrt %28 : vector<16x1xf32>
      %30 = vector.broadcast %29 : vector<16x1xf32> to vector<16x32xf32>
      %31 = arith.mulf %21, %30 : vector<16x32xf32>
      %c0_19 = arith.constant 0 : index
      %c0_20 = arith.constant 0 : index
      %32 = vector.load %arg5[%c0_19, %c0_20] : memref<1x32xf32, #tpu.memory_space<vmem>>, vector<1x32xf32>
      %33 = vector.broadcast %32 : vector<1x32xf32> to vector<16x32xf32>
      %34 = arith.mulf %31, %33 : vector<16x32xf32>
      %c0_21 = arith.constant 0 : index
      %c0_22 = arith.constant 0 : index
      %35 = vector.load %arg6[%c0_21, %c0_22] : memref<1x32xf32, #tpu.memory_space<vmem>>, vector<1x32xf32>
      %36 = vector.broadcast %35 : vector<1x32xf32> to vector<16x32xf32>
      %37 = arith.addf %34, %36 : vector<16x32xf32>
      %38 = arith.truncf %37 : vector<16x32xf32> to vector<16x32xbf16>
      %c0_23 = arith.constant 0 : index
      %c0_24 = arith.constant 0 : index
      %39 = vector.load %arg9[%c0_23, %c0_24] : memref<16x32xbf16, #tpu.memory_space<vmem>>, vector<16x32xbf16>
      tpu.vector_store %arg9[%c0_23, %c0_24], %38 {strides = array<i32>} : memref<16x32xbf16, #tpu.memory_space<vmem>>, vector<16x32xbf16>,
    } else {
    }
    %c0 = arith.constant 0 : index
    %c0_3 = arith.constant 0 : index
    %6 = vector.load %arg9[%c0, %c0_3] : memref<16x32xbf16, #tpu.memory_space<vmem>>, vector<16x32xbf16>
    %c0_4 = arith.constant 0 : index
    %c0_5 = arith.constant 0 : index
    %7 = vector.load %arg4[%c0_4, %c0_5] : memref<32x96xbf16, #tpu.memory_space<vmem>>, vector<32x96xbf16>
    %c0_6 = arith.constant 0 : index
    %c0_7 = arith.constant 0 : index
    %8 = vector.load %arg8[%c0_6, %c0_7] : memref<16x96xf32, #tpu.memory_space<vmem>>, vector<16x96xf32>
    %cst = arith.constant dense<0.000000e+00> : vector<16x96xf32>
    %9 = tpu.matmul %6, %7, %cst {dimension_numbers = #tpu.dot_dimension_numbers<[1], [0], [0], [1], [0, 0, 1, 1], [], []>} : vector<16x32xbf16>, vector<32x96xbf16>, vector<16x96xf32> -> vector<16x96xf32>
    %10 = arith.addf %8, %9 : vector<16x96xf32>
    %c0_8 = arith.constant 0 : index
    %c0_9 = arith.constant 0 : index
    %11 = vector.load %arg8[%c0_8, %c0_9] : memref<16x96xf32, #tpu.memory_space<vmem>>, vector<16x96xf32>
    tpu.vector_store %arg8[%c0_8, %c0_9], %10 {strides = array<i32>} : memref<16x96xf32, #tpu.memory_space<vmem>>, vector<16x96xf32>,
    %c0_i32_10 = arith.constant 0 : i32
    %12 = arith.cmpi eq, %arg2, %c0_i32_10 : i32
    %13 = arith.extui %12 : i1 to i32
    %c0_i32_11 = arith.constant 0 : i32
    %14 = arith.cmpi ne, %13, %c0_i32_11 : i32
    scf.if %14 {
      %c0_12 = arith.constant 0 : index
      %c0_13 = arith.constant 0 : index
      %15 = vector.load %arg8[%c0_12, %c0_13] : memref<16x96xf32, #tpu.memory_space<vmem>>, vector<16x96xf32>
      %16 = arith.truncf %15 : vector<16x96xf32> to vector<16x96xbf16>
      %c0_14 = arith.constant 0 : index
      %c0_15 = arith.constant 0 : index
      %17 = vector.load %arg7[%c0_14, %c0_15] : memref<16x96xbf16, #tpu.memory_space<vmem>>, vector<16x96xbf16>
      tpu.vector_store %arg7[%c0_14, %c0_15], %16 {strides = array<i32>} : memref<16x96xbf16, #tpu.memory_space<vmem>>, vector<16x96xbf16>,
    } else {
    }
    return
  }
  func.func @transform_0(%arg0: i32, %arg1: i32, %arg2: i32) -> (i32, i32) {
    %c0_i32 = arith.constant 0 : i32
    return %arg0, %arg2 : i32, i32
  }
  func.func @transform_1(%arg0: i32, %arg1: i32, %arg2: i32) -> (i32, i32) {
    %c0_i32 = arith.constant 0 : i32
    return %arg2, %arg1 : i32, i32
  }
  func.func @transform_2(%arg0: i32, %arg1: i32, %arg2: i32) -> (i32, i32) {
    %c0_i32 = arith.constant 0 : i32
    %c0_i32_0 = arith.constant 0 : i32
    return %c0_i32, %arg2 : i32, i32
  }
  func.func @transform_3(%arg0: i32, %arg1: i32, %arg2: i32) -> (i32, i32) {
    %c0_i32 = arith.constant 0 : i32
    %c0_i32_0 = arith.constant 0 : i32
    return %c0_i32, %arg2 : i32, i32
  }
  func.func @transform_4(%arg0: i32, %arg1: i32, %arg2: i32) -> (i32, i32) {
    %c0_i32 = arith.constant 0 : i32
    return %arg0, %arg1 : i32, i32
  }
}

module attributes {stable_mosaic.version = 11 : i64} {
  func.func @_attention_kernel(%arg0: i32, %arg1: i32, %arg2: memref<1x8x96xbf16, #tpu.memory_space<vmem>>, %arg3: memref<32x32xbf16, #tpu.memory_space<vmem>>, %arg4: memref<1x32xf32, #tpu.memory_space<vmem>>, %arg5: memref<1x8x32xf32, #tpu.memory_space<vmem>>, %arg6: memref<1x8x32xf32, #tpu.memory_space<vmem>>) attributes {dimension_semantics = [#tpu.dimension_semantics<parallel>, #tpu.dimension_semantics<parallel>], iteration_bounds = array<i64: 2, 1>, scalar_prefetch = 0 : i64, scratch_operands = 0 : i64, tpu.core_type = #tpu.core_type<tc>, window_params = [{transform_indices = @transform_0, window_bounds = array<i64: 1, 8, 96>}, {pipeline_mode = #tpu.pipeline_mode<synchronous>, transform_indices = @transform_1, window_bounds = array<i64: 32, 32>}, {pipeline_mode = #tpu.pipeline_mode<synchronous>, transform_indices = @transform_2, window_bounds = array<i64: 1, 32>}, {transform_indices = @transform_3, window_bounds = array<i64: 1, 8, 32>}, {transform_indices = @transform_4, window_bounds = array<i64: 1, 8, 32>}]} {
    %c0 = arith.constant 0 : index
    %c0_0 = arith.constant 0 : index
    %c0_1 = arith.constant 0 : index
    %0 = vector.load %arg2[%c0, %c0_0, %c0_1] : memref<1x8x96xbf16, #tpu.memory_space<vmem>>, vector<1x8x96xbf16>
    %1 = vector.shape_cast %0 : vector<1x8x96xbf16> to vector<8x96xbf16>
    %2 = tpu.iota {dimensions = array<i32: 1>} : vector<8x8xi32>
    %c5_i32 = arith.constant 5 : i32
    %3 = vector.broadcast %c5_i32 : i32 to vector<8x8xi32>
    %4 = arith.cmpi slt, %2, %3 : vector<8x8xi32>
    %c0_2 = arith.constant 0 : index
    %c0_3 = arith.constant 0 : index
    %c0_4 = arith.constant 0 : index
    %5 = vector.load %arg5[%c0_2, %c0_3, %c0_4] : memref<1x8x32xf32, #tpu.memory_space<vmem>>, vector<1x8x32xf32>
    %6 = vector.shape_cast %5 : vector<1x8x32xf32> to vector<8x32xf32>
    %c0_5 = arith.constant 0 : index
    %c0_6 = arith.constant 0 : index
    %7 = vector.load %arg4[%c0_5, %c0_6] : memref<1x32xf32, #tpu.memory_space<vmem>>, vector<1x32xf32>
    %8 = vector.broadcast %7 : vector<1x32xf32> to vector<8x32xf32>
    %9 = arith.addf %6, %8 : vector<8x32xf32>
    %10 = vector.extract_strided_slice %1 {offsets = [0, 0], sizes = [8, 8], strides = [1, 1]} : vector<8x96xbf16> to vector<8x8xbf16>
    %11 = vector.extract_strided_slice %1 {offsets = [0, 32], sizes = [8, 8], strides = [1, 1]} : vector<8x96xbf16> to vector<8x8xbf16>
    %12 = vector.extract_strided_slice %1 {offsets = [0, 64], sizes = [8, 8], strides = [1, 1]} : vector<8x96xbf16> to vector<8x8xbf16>
    %cst = arith.constant dense<0.000000e+00> : vector<8x8xf32>
    %13 = tpu.matmul %10, %11, %cst {dimension_numbers = #tpu.dot_dimension_numbers<[1], [1], [0], [0], [0, 0, 1, 0], [], []>} : vector<8x8xbf16>, vector<8x8xbf16>, vector<8x8xf32> -> vector<8x8xf32>
    %cst_7 = arith.constant 0.353553385 : f32
    %14 = vector.broadcast %cst_7 : f32 to vector<8x8xf32>
    %15 = arith.mulf %13, %14 : vector<8x8xf32>
    %cst_8 = arith.constant -1.000000e+30 : f32
    %16 = vector.broadcast %cst_8 : f32 to vector<8x8xf32>
    %17 = arith.select %4, %15, %16 : vector<8x8xi1>, vector<8x8xf32>
    %cst_9 = arith.constant dense<0xFF800000> : vector<8xf32>
    %18 = vector.multi_reduction <maximumf>, %17, %cst_9 [1] : vector<8x8xf32> to vector<8xf32>
    %19 = vector.shape_cast %18 : vector<8xf32> to vector<8x1xf32>
    %20 = vector.broadcast %19 : vector<8x1xf32> to vector<8x8xf32>
    %21 = arith.subf %17, %20 : vector<8x8xf32>
    %22 = math.exp %21 : vector<8x8xf32>
    %cst_10 = arith.constant dense<0.000000e+00> : vector<8xf32>
    %23 = vector.multi_reduction <add>, %22, %cst_10 [1] : vector<8x8xf32> to vector<8xf32>
    %24 = vector.shape_cast %23 : vector<8xf32> to vector<8x1xf32>
    %25 = tpu.reciprocal %24 {approx = true} : vector<8x1xf32> -> vector<8x1xf32>
    %26 = vector.broadcast %25 : vector<8x1xf32> to vector<8x8xf32>
    %27 = arith.mulf %22, %26 : vector<8x8xf32>
    %28 = arith.truncf %27 : vector<8x8xf32> to vector<8x8xbf16>
    %cst_11 = arith.constant dense<0.000000e+00> : vector<8x8xf32>
    %29 = tpu.matmul %28, %12, %cst_11 {dimension_numbers = #tpu.dot_dimension_numbers<[1], [0], [0], [1], [0, 0, 1, 1], [], []>} : vector<8x8xbf16>, vector<8x8xbf16>, vector<8x8xf32> -> vector<8x8xf32>
    %c0_12 = arith.constant 0 : index
    %c0_13 = arith.constant 0 : index
    %30 = vector.load %arg3[%c0_12, %c0_13] : memref<32x32xbf16, #tpu.memory_space<vmem>>, vector<8x32xbf16>
    %31 = arith.truncf %29 : vector<8x8xf32> to vector<8x8xbf16>
    %cst_14 = arith.constant dense<0.000000e+00> : vector<8x32xf32>
    %32 = tpu.matmul %31, %30, %cst_14 {dimension_numbers = #tpu.dot_dimension_numbers<[1], [0], [0], [1], [0, 0, 1, 1], [], []>} : vector<8x8xbf16>, vector<8x32xbf16>, vector<8x32xf32> -> vector<8x32xf32>
    %33 = arith.addf %9, %32 : vector<8x32xf32>
    %34 = vector.extract_strided_slice %1 {offsets = [0, 8], sizes = [8, 8], strides = [1, 1]} : vector<8x96xbf16> to vector<8x8xbf16>
    %35 = vector.extract_strided_slice %1 {offsets = [0, 40], sizes = [8, 8], strides = [1, 1]} : vector<8x96xbf16> to vector<8x8xbf16>
    %36 = vector.extract_strided_slice %1 {offsets = [0, 72], sizes = [8, 8], strides = [1, 1]} : vector<8x96xbf16> to vector<8x8xbf16>
    %cst_15 = arith.constant dense<0.000000e+00> : vector<8x8xf32>
    %37 = tpu.matmul %34, %35, %cst_15 {dimension_numbers = #tpu.dot_dimension_numbers<[1], [1], [0], [0], [0, 0, 1, 0], [], []>} : vector<8x8xbf16>, vector<8x8xbf16>, vector<8x8xf32> -> vector<8x8xf32>
    %cst_16 = arith.constant 0.353553385 : f32
    %38 = vector.broadcast %cst_16 : f32 to vector<8x8xf32>
    %39 = arith.mulf %37, %38 : vector<8x8xf32>
    %cst_17 = arith.constant -1.000000e+30 : f32
    %40 = vector.broadcast %cst_17 : f32 to vector<8x8xf32>
    %41 = arith.select %4, %39, %40 : vector<8x8xi1>, vector<8x8xf32>
    %cst_18 = arith.constant dense<0xFF800000> : vector<8xf32>
    %42 = vector.multi_reduction <maximumf>, %41, %cst_18 [1] : vector<8x8xf32> to vector<8xf32>
    %43 = vector.shape_cast %42 : vector<8xf32> to vector<8x1xf32>
    %44 = vector.broadcast %43 : vector<8x1xf32> to vector<8x8xf32>
    %45 = arith.subf %41, %44 : vector<8x8xf32>
    %46 = math.exp %45 : vector<8x8xf32>
    %cst_19 = arith.constant dense<0.000000e+00> : vector<8xf32>
    %47 = vector.multi_reduction <add>, %46, %cst_19 [1] : vector<8x8xf32> to vector<8xf32>
    %48 = vector.shape_cast %47 : vector<8xf32> to vector<8x1xf32>
    %49 = tpu.reciprocal %48 {approx = true} : vector<8x1xf32> -> vector<8x1xf32>
    %50 = vector.broadcast %49 : vector<8x1xf32> to vector<8x8xf32>
    %51 = arith.mulf %46, %50 : vector<8x8xf32>
    %52 = arith.truncf %51 : vector<8x8xf32> to vector<8x8xbf16>
    %cst_20 = arith.constant dense<0.000000e+00> : vector<8x8xf32>
    %53 = tpu.matmul %52, %36, %cst_20 {dimension_numbers = #tpu.dot_dimension_numbers<[1], [0], [0], [1], [0, 0, 1, 1], [], []>} : vector<8x8xbf16>, vector<8x8xbf16>, vector<8x8xf32> -> vector<8x8xf32>
    %c8 = arith.constant 8 : index
    %c0_21 = arith.constant 0 : index
    %54 = vector.load %arg3[%c8, %c0_21] : memref<32x32xbf16, #tpu.memory_space<vmem>>, vector<8x32xbf16>
    %55 = arith.truncf %53 : vector<8x8xf32> to vector<8x8xbf16>
    %cst_22 = arith.constant dense<0.000000e+00> : vector<8x32xf32>
    %56 = tpu.matmul %55, %54, %cst_22 {dimension_numbers = #tpu.dot_dimension_numbers<[1], [0], [0], [1], [0, 0, 1, 1], [], []>} : vector<8x8xbf16>, vector<8x32xbf16>, vector<8x32xf32> -> vector<8x32xf32>
    %57 = arith.addf %33, %56 : vector<8x32xf32>
    %58 = vector.extract_strided_slice %1 {offsets = [0, 16], sizes = [8, 8], strides = [1, 1]} : vector<8x96xbf16> to vector<8x8xbf16>
    %59 = vector.extract_strided_slice %1 {offsets = [0, 48], sizes = [8, 8], strides = [1, 1]} : vector<8x96xbf16> to vector<8x8xbf16>
    %60 = vector.extract_strided_slice %1 {offsets = [0, 80], sizes = [8, 8], strides = [1, 1]} : vector<8x96xbf16> to vector<8x8xbf16>
    %cst_23 = arith.constant dense<0.000000e+00> : vector<8x8xf32>
    %61 = tpu.matmul %58, %59, %cst_23 {dimension_numbers = #tpu.dot_dimension_numbers<[1], [1], [0], [0], [0, 0, 1, 0], [], []>} : vector<8x8xbf16>, vector<8x8xbf16>, vector<8x8xf32> -> vector<8x8xf32>
    %cst_24 = arith.constant 0.353553385 : f32
    %62 = vector.broadcast %cst_24 : f32 to vector<8x8xf32>
    %63 = arith.mulf %61, %62 : vector<8x8xf32>
    %cst_25 = arith.constant -1.000000e+30 : f32
    %64 = vector.broadcast %cst_25 : f32 to vector<8x8xf32>
    %65 = arith.select %4, %63, %64 : vector<8x8xi1>, vector<8x8xf32>
    %cst_26 = arith.constant dense<0xFF800000> : vector<8xf32>
    %66 = vector.multi_reduction <maximumf>, %65, %cst_26 [1] : vector<8x8xf32> to vector<8xf32>
    %67 = vector.shape_cast %66 : vector<8xf32> to vector<8x1xf32>
    %68 = vector.broadcast %67 : vector<8x1xf32> to vector<8x8xf32>
    %69 = arith.subf %65, %68 : vector<8x8xf32>
    %70 = math.exp %69 : vector<8x8xf32>
    %cst_27 = arith.constant dense<0.000000e+00> : vector<8xf32>
    %71 = vector.multi_reduction <add>, %70, %cst_27 [1] : vector<8x8xf32> to vector<8xf32>
    %72 = vector.shape_cast %71 : vector<8xf32> to vector<8x1xf32>
    %73 = tpu.reciprocal %72 {approx = true} : vector<8x1xf32> -> vector<8x1xf32>
    %74 = vector.broadcast %73 : vector<8x1xf32> to vector<8x8xf32>
    %75 = arith.mulf %70, %74 : vector<8x8xf32>
    %76 = arith.truncf %75 : vector<8x8xf32> to vector<8x8xbf16>
    %cst_28 = arith.constant dense<0.000000e+00> : vector<8x8xf32>
    %77 = tpu.matmul %76, %60, %cst_28 {dimension_numbers = #tpu.dot_dimension_numbers<[1], [0], [0], [1], [0, 0, 1, 1], [], []>} : vector<8x8xbf16>, vector<8x8xbf16>, vector<8x8xf32> -> vector<8x8xf32>
    %c16 = arith.constant 16 : index
    %c0_29 = arith.constant 0 : index
    %78 = vector.load %arg3[%c16, %c0_29] : memref<32x32xbf16, #tpu.memory_space<vmem>>, vector<8x32xbf16>
    %79 = arith.truncf %77 : vector<8x8xf32> to vector<8x8xbf16>
    %cst_30 = arith.constant dense<0.000000e+00> : vector<8x32xf32>
    %80 = tpu.matmul %79, %78, %cst_30 {dimension_numbers = #tpu.dot_dimension_numbers<[1], [0], [0], [1], [0, 0, 1, 1], [], []>} : vector<8x8xbf16>, vector<8x32xbf16>, vector<8x32xf32> -> vector<8x32xf32>
    %81 = arith.addf %57, %80 : vector<8x32xf32>
    %82 = vector.extract_strided_slice %1 {offsets = [0, 24], sizes = [8, 8], strides = [1, 1]} : vector<8x96xbf16> to vector<8x8xbf16>
    %83 = vector.extract_strided_slice %1 {offsets = [0, 56], sizes = [8, 8], strides = [1, 1]} : vector<8x96xbf16> to vector<8x8xbf16>
    %84 = vector.extract_strided_slice %1 {offsets = [0, 88], sizes = [8, 8], strides = [1, 1]} : vector<8x96xbf16> to vector<8x8xbf16>
    %cst_31 = arith.constant dense<0.000000e+00> : vector<8x8xf32>
    %85 = tpu.matmul %82, %83, %cst_31 {dimension_numbers = #tpu.dot_dimension_numbers<[1], [1], [0], [0], [0, 0, 1, 0], [], []>} : vector<8x8xbf16>, vector<8x8xbf16>, vector<8x8xf32> -> vector<8x8xf32>
    %cst_32 = arith.constant 0.353553385 : f32
    %86 = vector.broadcast %cst_32 : f32 to vector<8x8xf32>
    %87 = arith.mulf %85, %86 : vector<8x8xf32>
    %cst_33 = arith.constant -1.000000e+30 : f32
    %88 = vector.broadcast %cst_33 : f32 to vector<8x8xf32>
    %89 = arith.select %4, %87, %88 : vector<8x8xi1>, vector<8x8xf32>
    %cst_34 = arith.constant dense<0xFF800000> : vector<8xf32>
    %90 = vector.multi_reduction <maximumf>, %89, %cst_34 [1] : vector<8x8xf32> to vector<8xf32>
    %91 = vector.shape_cast %90 : vector<8xf32> to vector<8x1xf32>
    %92 = vector.broadcast %91 : vector<8x1xf32> to vector<8x8xf32>
    %93 = arith.subf %89, %92 : vector<8x8xf32>
    %94 = math.exp %93 : vector<8x8xf32>
    %cst_35 = arith.constant dense<0.000000e+00> : vector<8xf32>
    %95 = vector.multi_reduction <add>, %94, %cst_35 [1] : vector<8x8xf32> to vector<8xf32>
    %96 = vector.shape_cast %95 : vector<8xf32> to vector<8x1xf32>
    %97 = tpu.reciprocal %96 {approx = true} : vector<8x1xf32> -> vector<8x1xf32>
    %98 = vector.broadcast %97 : vector<8x1xf32> to vector<8x8xf32>
    %99 = arith.mulf %94, %98 : vector<8x8xf32>
    %100 = arith.truncf %99 : vector<8x8xf32> to vector<8x8xbf16>
    %cst_36 = arith.constant dense<0.000000e+00> : vector<8x8xf32>
    %101 = tpu.matmul %100, %84, %cst_36 {dimension_numbers = #tpu.dot_dimension_numbers<[1], [0], [0], [1], [0, 0, 1, 1], [], []>} : vector<8x8xbf16>, vector<8x8xbf16>, vector<8x8xf32> -> vector<8x8xf32>
    %c24 = arith.constant 24 : index
    %c0_37 = arith.constant 0 : index
    %102 = vector.load %arg3[%c24, %c0_37] : memref<32x32xbf16, #tpu.memory_space<vmem>>, vector<8x32xbf16>
    %103 = arith.truncf %101 : vector<8x8xf32> to vector<8x8xbf16>
    %cst_38 = arith.constant dense<0.000000e+00> : vector<8x32xf32>
    %104 = tpu.matmul %103, %102, %cst_38 {dimension_numbers = #tpu.dot_dimension_numbers<[1], [0], [0], [1], [0, 0, 1, 1], [], []>} : vector<8x8xbf16>, vector<8x32xbf16>, vector<8x32xf32> -> vector<8x32xf32>
    %105 = arith.addf %81, %104 : vector<8x32xf32>
    %c0_39 = arith.constant 0 : index
    %c0_40 = arith.constant 0 : index
    %c0_41 = arith.constant 0 : index
    %106 = vector.load %arg6[%c0_39, %c0_40, %c0_41] : memref<1x8x32xf32, #tpu.memory_space<vmem>>, vector<1x8x32xf32>
    %107 = vector.shape_cast %106 : vector<1x8x32xf32> to vector<8x32xf32>
    %108 = vector.shape_cast %105 : vector<8x32xf32> to vector<1x8x32xf32>
    tpu.vector_store %arg6[%c0_39, %c0_40, %c0_41], %108 {strides = array<i32>} : memref<1x8x32xf32, #tpu.memory_space<vmem>>, vector<1x8x32xf32>,
    return
  }
  func.func @transform_0(%arg0: i32, %arg1: i32) -> (i32, i32, i32) {
    %c0_i32 = arith.constant 0 : i32
    %c0_i32_0 = arith.constant 0 : i32
    %c0_i32_1 = arith.constant 0 : i32
    return %arg0, %c0_i32, %c0_i32_0 : i32, i32, i32
  }
  func.func @transform_1(%arg0: i32, %arg1: i32) -> (i32, i32) {
    %c0_i32 = arith.constant 0 : i32
    %c0_i32_0 = arith.constant 0 : i32
    %c0_i32_1 = arith.constant 0 : i32
    return %c0_i32, %c0_i32_0 : i32, i32
  }
  func.func @transform_2(%arg0: i32, %arg1: i32) -> (i32, i32) {
    %c0_i32 = arith.constant 0 : i32
    %c0_i32_0 = arith.constant 0 : i32
    %c0_i32_1 = arith.constant 0 : i32
    return %c0_i32, %c0_i32_0 : i32, i32
  }
  func.func @transform_3(%arg0: i32, %arg1: i32) -> (i32, i32, i32) {
    %c0_i32 = arith.constant 0 : i32
    %c0_i32_0 = arith.constant 0 : i32
    return %arg0, %arg1, %c0_i32 : i32, i32, i32
  }
  func.func @transform_4(%arg0: i32, %arg1: i32) -> (i32, i32, i32) {
    %c0_i32 = arith.constant 0 : i32
    %c0_i32_0 = arith.constant 0 : i32
    return %arg0, %arg1, %c0_i32 : i32, i32, i32
  }
}

module attributes {stable_mosaic.version = 11 : i64} {
  func.func @_linear_kernel(%arg0: i32, %arg1: i32, %arg2: i32, %arg3: memref<16x32xf32, #tpu.memory_space<vmem>>, %arg4: memref<32x64xbf16, #tpu.memory_space<vmem>>, %arg5: memref<1x32xf32, #tpu.memory_space<vmem>>, %arg6: memref<1x32xf32, #tpu.memory_space<vmem>>, %arg7: memref<1x64xf32, #tpu.memory_space<vmem>>, %arg8: memref<16x64xbf16, #tpu.memory_space<vmem>>, %arg9: memref<16x64xf32, #tpu.memory_space<vmem>>, %arg10: memref<16x32xbf16, #tpu.memory_space<vmem>>) attributes {dimension_semantics = [#tpu.dimension_semantics<parallel>, #tpu.dimension_semantics<arbitrary>, #tpu.dimension_semantics<arbitrary>], iteration_bounds = array<i64: 1, 1, 1>, scalar_prefetch = 0 : i64, scratch_operands = 2 : i64, tpu.core_type = #tpu.core_type<tc>, window_params = [{transform_indices = @transform_0, window_bounds = array<i64: 16, 32>}, {transform_indices = @transform_1, window_bounds = array<i64: 32, 64>}, {transform_indices = @transform_2, window_bounds = array<i64: 1, 32>}, {transform_indices = @transform_3, window_bounds = array<i64: 1, 32>}, {transform_indices = @transform_4, window_bounds = array<i64: 1, 64>}, {transform_indices = @transform_5, window_bounds = array<i64: 16, 64>}]} {
    %c0_i32 = arith.constant 0 : i32
    %0 = arith.cmpi eq, %arg2, %c0_i32 : i32
    %1 = arith.extui %0 : i1 to i32
    %c0_i32_0 = arith.constant 0 : i32
    %2 = arith.cmpi ne, %1, %c0_i32_0 : i32
    scf.if %2 {
      %cst_12 = arith.constant 0.000000e+00 : f32
      %15 = vector.broadcast %cst_12 : f32 to vector<16x64xf32>
      %c0_13 = arith.constant 0 : index
      %c0_14 = arith.constant 0 : index
      %16 = vector.load %arg9[%c0_13, %c0_14] : memref<16x64xf32, #tpu.memory_space<vmem>>, vector<16x64xf32>
      tpu.vector_store %arg9[%c0_13, %c0_14], %15 {strides = array<i32>} : memref<16x64xf32, #tpu.memory_space<vmem>>, vector<16x64xf32>,
    } else {
    }
    %c0_i32_1 = arith.constant 0 : i32
    %3 = arith.cmpi eq, %arg1, %c0_i32_1 : i32
    %4 = arith.extui %3 : i1 to i32
    %c0_i32_2 = arith.constant 0 : i32
    %5 = arith.cmpi ne, %4, %c0_i32_2 : i32
    scf.if %5 {
      %c0_12 = arith.constant 0 : index
      %c0_13 = arith.constant 0 : index
      %15 = vector.load %arg3[%c0_12, %c0_13] : memref<16x32xf32, #tpu.memory_space<vmem>>, vector<16x32xf32>
      %cst_14 = arith.constant dense<0.000000e+00> : vector<16xf32>
      %16 = vector.multi_reduction <add>, %15, %cst_14 [1] : vector<16x32xf32> to vector<16xf32>
      %17 = vector.shape_cast %16 : vector<16xf32> to vector<16x1xf32>
      %cst_15 = arith.constant 3.200000e+01 : f32
      %18 = vector.broadcast %cst_15 : f32 to vector<16x1xf32>
      %19 = arith.divf %17, %18 : vector<16x1xf32>
      %20 = vector.broadcast %19 : vector<16x1xf32> to vector<16x32xf32>
      %21 = arith.subf %15, %20 : vector<16x32xf32>
      %22 = arith.mulf %21, %21 : vector<16x32xf32>
      %cst_16 = arith.constant dense<0.000000e+00> : vector<16xf32>
      %23 = vector.multi_reduction <add>, %22, %cst_16 [1] : vector<16x32xf32> to vector<16xf32>
      %24 = vector.shape_cast %23 : vector<16xf32> to vector<16x1xf32>
      %cst_17 = arith.constant 3.200000e+01 : f32
      %25 = vector.broadcast %cst_17 : f32 to vector<16x1xf32>
      %26 = arith.divf %24, %25 : vector<16x1xf32>
      %cst_18 = arith.constant 9.99999974E-6 : f32
      %27 = vector.broadcast %cst_18 : f32 to vector<16x1xf32>
      %28 = arith.addf %26, %27 : vector<16x1xf32>
      %29 = math.rsqrt %28 : vector<16x1xf32>
      %30 = vector.broadcast %29 : vector<16x1xf32> to vector<16x32xf32>
      %31 = arith.mulf %21, %30 : vector<16x32xf32>
      %c0_19 = arith.constant 0 : index
      %c0_20 = arith.constant 0 : index
      %32 = vector.load %arg5[%c0_19, %c0_20] : memref<1x32xf32, #tpu.memory_space<vmem>>, vector<1x32xf32>
      %33 = vector.broadcast %32 : vector<1x32xf32> to vector<16x32xf32>
      %34 = arith.mulf %31, %33 : vector<16x32xf32>
      %c0_21 = arith.constant 0 : index
      %c0_22 = arith.constant 0 : index
      %35 = vector.load %arg6[%c0_21, %c0_22] : memref<1x32xf32, #tpu.memory_space<vmem>>, vector<1x32xf32>
      %36 = vector.broadcast %35 : vector<1x32xf32> to vector<16x32xf32>
      %37 = arith.addf %34, %36 : vector<16x32xf32>
      %38 = arith.truncf %37 : vector<16x32xf32> to vector<16x32xbf16>
      %c0_23 = arith.constant 0 : index
      %c0_24 = arith.constant 0 : index
      %39 = vector.load %arg10[%c0_23, %c0_24] : memref<16x32xbf16, #tpu.memory_space<vmem>>, vector<16x32xbf16>
      tpu.vector_store %arg10[%c0_23, %c0_24], %38 {strides = array<i32>} : memref<16x32xbf16, #tpu.memory_space<vmem>>, vector<16x32xbf16>,
    } else {
    }
    %c0 = arith.constant 0 : index
    %c0_3 = arith.constant 0 : index
    %6 = vector.load %arg10[%c0, %c0_3] : memref<16x32xbf16, #tpu.memory_space<vmem>>, vector<16x32xbf16>
    %c0_4 = arith.constant 0 : index
    %c0_5 = arith.constant 0 : index
    %7 = vector.load %arg4[%c0_4, %c0_5] : memref<32x64xbf16, #tpu.memory_space<vmem>>, vector<32x64xbf16>
    %c0_6 = arith.constant 0 : index
    %c0_7 = arith.constant 0 : index
    %8 = vector.load %arg9[%c0_6, %c0_7] : memref<16x64xf32, #tpu.memory_space<vmem>>, vector<16x64xf32>
    %cst = arith.constant dense<0.000000e+00> : vector<16x64xf32>
    %9 = tpu.matmul %6, %7, %cst {dimension_numbers = #tpu.dot_dimension_numbers<[1], [0], [0], [1], [0, 0, 1, 1], [], []>} : vector<16x32xbf16>, vector<32x64xbf16>, vector<16x64xf32> -> vector<16x64xf32>
    %10 = arith.addf %8, %9 : vector<16x64xf32>
    %c0_8 = arith.constant 0 : index
    %c0_9 = arith.constant 0 : index
    %11 = vector.load %arg9[%c0_8, %c0_9] : memref<16x64xf32, #tpu.memory_space<vmem>>, vector<16x64xf32>
    tpu.vector_store %arg9[%c0_8, %c0_9], %10 {strides = array<i32>} : memref<16x64xf32, #tpu.memory_space<vmem>>, vector<16x64xf32>,
    %c0_i32_10 = arith.constant 0 : i32
    %12 = arith.cmpi eq, %arg2, %c0_i32_10 : i32
    %13 = arith.extui %12 : i1 to i32
    %c0_i32_11 = arith.constant 0 : i32
    %14 = arith.cmpi ne, %13, %c0_i32_11 : i32
    scf.if %14 {
      %c0_12 = arith.constant 0 : index
      %c0_13 = arith.constant 0 : index
      %15 = vector.load %arg9[%c0_12, %c0_13] : memref<16x64xf32, #tpu.memory_space<vmem>>, vector<16x64xf32>
      %c0_14 = arith.constant 0 : index
      %c0_15 = arith.constant 0 : index
      %16 = vector.load %arg7[%c0_14, %c0_15] : memref<1x64xf32, #tpu.memory_space<vmem>>, vector<1x64xf32>
      %17 = vector.broadcast %16 : vector<1x64xf32> to vector<16x64xf32>
      %18 = arith.addf %15, %17 : vector<16x64xf32>
      %cst_16 = arith.constant 5.000000e-01 : f32
      %19 = vector.broadcast %cst_16 : f32 to vector<16x64xf32>
      %20 = arith.mulf %19, %18 : vector<16x64xf32>
      %cst_17 = arith.constant 0.707106769 : f32
      %21 = vector.broadcast %cst_17 : f32 to vector<16x64xf32>
      %22 = arith.mulf %18, %21 : vector<16x64xf32>
      %cst_18 = arith.constant -3.8325069 : f32
      %cst_19 = arith.constant 3.8325069 : f32
      %23 = vector.broadcast %cst_18 : f32 to vector<16x64xf32>
      %24 = arith.maximumf %23, %22 : vector<16x64xf32>
      %25 = vector.broadcast %cst_19 : f32 to vector<16x64xf32>
      %26 = arith.minimumf %25, %24 : vector<16x64xf32>
      %27 = arith.mulf %26, %26 : vector<16x64xf32>
      %cst_20 = arith.constant -2.72614237E-10 : f32
      %28 = vector.broadcast %cst_20 : f32 to vector<16x64xf32>
      %29 = arith.mulf %28, %27 : vector<16x64xf32>
      %cst_21 = arith.constant 2.77068146E-8 : f32
      %30 = vector.broadcast %cst_21 : f32 to vector<16x64xf32>
      %31 = arith.addf %29, %30 : vector<16x64xf32>
      %32 = arith.mulf %31, %27 : vector<16x64xf32>
      %cst_22 = arith.constant -2.10102394E-6 : f32
      %33 = vector.broadcast %cst_22 : f32 to vector<16x64xf32>
      %34 = arith.addf %32, %33 : vector<16x64xf32>
      %35 = arith.mulf %34, %27 : vector<16x64xf32>
      %cst_23 = arith.constant -5.69250624E-5 : f32
      %36 = vector.broadcast %cst_23 : f32 to vector<16x64xf32>
      %37 = arith.addf %35, %36 : vector<16x64xf32>
      %38 = arith.mulf %37, %27 : vector<16x64xf32>
      %cst_24 = arith.constant -7.34990637E-4 : f32
      %39 = vector.broadcast %cst_24 : f32 to vector<16x64xf32>
      %40 = arith.addf %38, %39 : vector<16x64xf32>
      %41 = arith.mulf %40, %27 : vector<16x64xf32>
      %cst_25 = arith.constant -2.954600e-03 : f32
      %42 = vector.broadcast %cst_25 : f32 to vector<16x64xf32>
      %43 = arith.addf %41, %42 : vector<16x64xf32>
      %44 = arith.mulf %43, %27 : vector<16x64xf32>
      %cst_26 = arith.constant -0.0160960332 : f32
      %45 = vector.broadcast %cst_26 : f32 to vector<16x64xf32>
      %46 = arith.addf %44, %45 : vector<16x64xf32>
      %47 = arith.mulf %46, %26 : vector<16x64xf32>
      %cst_27 = arith.constant -1.45660715E-5 : f32
      %48 = vector.broadcast %cst_27 : f32 to vector<16x64xf32>
      %49 = arith.mulf %48, %27 : vector<16x64xf32>
      %cst_28 = arith.constant -2.13374049E-4 : f32
      %50 = vector.broadcast %cst_28 : f32 to vector<16x64xf32>
      %51 = arith.addf %49, %50 : vector<16x64xf32>
      %52 = arith.mulf %51, %27 : vector<16x64xf32>
      %cst_29 = arith.constant -0.00168282702 : f32
      %53 = vector.broadcast %cst_29 : f32 to vector<16x64xf32>
      %54 = arith.addf %52, %53 : vector<16x64xf32>
      %55 = arith.mulf %54, %27 : vector<16x64xf32>
      %cst_30 = arith.constant -0.00737332925 : f32
      %56 = vector.broadcast %cst_30 : f32 to vector<16x64xf32>
      %57 = arith.addf %55, %56 : vector<16x64xf32>
      %58 = arith.mulf %57, %27 : vector<16x64xf32>
      %cst_31 = arith.constant -0.0142647391 : f32
      %59 = vector.broadcast %cst_31 : f32 to vector<16x64xf32>
      %60 = arith.addf %58, %59 : vector<16x64xf32>
      %61 = tpu.reciprocal %60 {approx = true} : vector<16x64xf32> -> vector<16x64xf32>
      %62 = arith.mulf %47, %61 : vector<16x64xf32>
      %cst_32 = arith.constant 1.000000e+00 : f32
      %63 = vector.broadcast %cst_32 : f32 to vector<16x64xf32>
      %64 = arith.addf %63, %62 : vector<16x64xf32>
      %65 = arith.mulf %20, %64 : vector<16x64xf32>
      %66 = arith.truncf %65 : vector<16x64xf32> to vector<16x64xbf16>
      %c0_33 = arith.constant 0 : index
      %c0_34 = arith.constant 0 : index
      %67 = vector.load %arg8[%c0_33, %c0_34] : memref<16x64xbf16, #tpu.memory_space<vmem>>, vector<16x64xbf16>
      tpu.vector_store %arg8[%c0_33, %c0_34], %66 {strides = array<i32>} : memref<16x64xbf16, #tpu.memory_space<vmem>>, vector<16x64xbf16>,
    } else {
    }
    return
  }
  func.func @transform_0(%arg0: i32, %arg1: i32, %arg2: i32) -> (i32, i32) {
    %c0_i32 = arith.constant 0 : i32
    return %arg0, %arg2 : i32, i32
  }
  func.func @transform_1(%arg0: i32, %arg1: i32, %arg2: i32) -> (i32, i32) {
    %c0_i32 = arith.constant 0 : i32
    return %arg2, %arg1 : i32, i32
  }
  func.func @transform_2(%arg0: i32, %arg1: i32, %arg2: i32) -> (i32, i32) {
    %c0_i32 = arith.constant 0 : i32
    %c0_i32_0 = arith.constant 0 : i32
    return %c0_i32, %arg2 : i32, i32
  }
  func.func @transform_3(%arg0: i32, %arg1: i32, %arg2: i32) -> (i32, i32) {
    %c0_i32 = arith.constant 0 : i32
    %c0_i32_0 = arith.constant 0 : i32
    return %c0_i32, %arg2 : i32, i32
  }
  func.func @transform_4(%arg0: i32, %arg1: i32, %arg2: i32) -> (i32, i32) {
    %c0_i32 = arith.constant 0 : i32
    %c0_i32_0 = arith.constant 0 : i32
    return %c0_i32, %arg1 : i32, i32
  }
  func.func @transform_5(%arg0: i32, %arg1: i32, %arg2: i32) -> (i32, i32) {
    %c0_i32 = arith.constant 0 : i32
    return %arg0, %arg1 : i32, i32
  }
}

module attributes {stable_mosaic.version = 11 : i64} {
  func.func @_linear_kernel(%arg0: i32, %arg1: i32, %arg2: i32, %arg3: memref<16x64xbf16, #tpu.memory_space<vmem>>, %arg4: memref<64x32xbf16, #tpu.memory_space<vmem>>, %arg5: memref<1x32xf32, #tpu.memory_space<vmem>>, %arg6: memref<16x32xf32, #tpu.memory_space<vmem>>, %arg7: memref<16x32xf32, #tpu.memory_space<vmem>>) attributes {dimension_semantics = [#tpu.dimension_semantics<parallel>, #tpu.dimension_semantics<parallel>, #tpu.dimension_semantics<arbitrary>], iteration_bounds = array<i64: 1, 1, 1>, scalar_prefetch = 0 : i64, scratch_operands = 0 : i64, tpu.core_type = #tpu.core_type<tc>, window_params = [{transform_indices = @transform_0, window_bounds = array<i64: 16, 64>}, {transform_indices = @transform_1, window_bounds = array<i64: 64, 32>}, {transform_indices = @transform_2, window_bounds = array<i64: 1, 32>}, {transform_indices = @transform_3, window_bounds = array<i64: 16, 32>}, {transform_indices = @transform_4, window_bounds = array<i64: 16, 32>}]} {
    %c0_i32 = arith.constant 0 : i32
    %0 = arith.cmpi eq, %arg2, %c0_i32 : i32
    %1 = arith.extui %0 : i1 to i32
    %c0_i32_0 = arith.constant 0 : i32
    %2 = arith.cmpi ne, %1, %c0_i32_0 : i32
    scf.if %2 {
      %cst_10 = arith.constant 0.000000e+00 : f32
      %12 = vector.broadcast %cst_10 : f32 to vector<16x32xf32>
      %c0_11 = arith.constant 0 : index
      %c0_12 = arith.constant 0 : index
      %13 = vector.load %arg7[%c0_11, %c0_12] : memref<16x32xf32, #tpu.memory_space<vmem>>, vector<16x32xf32>
      tpu.vector_store %arg7[%c0_11, %c0_12], %12 {strides = array<i32>} : memref<16x32xf32, #tpu.memory_space<vmem>>, vector<16x32xf32>,
    } else {
    }
    %c0 = arith.constant 0 : index
    %c0_1 = arith.constant 0 : index
    %3 = vector.load %arg3[%c0, %c0_1] : memref<16x64xbf16, #tpu.memory_space<vmem>>, vector<16x64xbf16>
    %c0_2 = arith.constant 0 : index
    %c0_3 = arith.constant 0 : index
    %4 = vector.load %arg4[%c0_2, %c0_3] : memref<64x32xbf16, #tpu.memory_space<vmem>>, vector<64x32xbf16>
    %c0_4 = arith.constant 0 : index
    %c0_5 = arith.constant 0 : index
    %5 = vector.load %arg7[%c0_4, %c0_5] : memref<16x32xf32, #tpu.memory_space<vmem>>, vector<16x32xf32>
    %cst = arith.constant dense<0.000000e+00> : vector<16x32xf32>
    %6 = tpu.matmul %3, %4, %cst {dimension_numbers = #tpu.dot_dimension_numbers<[1], [0], [0], [1], [0, 0, 1, 1], [], []>} : vector<16x64xbf16>, vector<64x32xbf16>, vector<16x32xf32> -> vector<16x32xf32>
    %7 = arith.addf %5, %6 : vector<16x32xf32>
    %c0_6 = arith.constant 0 : index
    %c0_7 = arith.constant 0 : index
    %8 = vector.load %arg7[%c0_6, %c0_7] : memref<16x32xf32, #tpu.memory_space<vmem>>, vector<16x32xf32>
    tpu.vector_store %arg7[%c0_6, %c0_7], %7 {strides = array<i32>} : memref<16x32xf32, #tpu.memory_space<vmem>>, vector<16x32xf32>,
    %c0_i32_8 = arith.constant 0 : i32
    %9 = arith.cmpi eq, %arg2, %c0_i32_8 : i32
    %10 = arith.extui %9 : i1 to i32
    %c0_i32_9 = arith.constant 0 : i32
    %11 = arith.cmpi ne, %10, %c0_i32_9 : i32
    scf.if %11 {
      %c0_10 = arith.constant 0 : index
      %c0_11 = arith.constant 0 : index
      %12 = vector.load %arg7[%c0_10, %c0_11] : memref<16x32xf32, #tpu.memory_space<vmem>>, vector<16x32xf32>
      %c0_12 = arith.constant 0 : index
      %c0_13 = arith.constant 0 : index
      %13 = vector.load %arg5[%c0_12, %c0_13] : memref<1x32xf32, #tpu.memory_space<vmem>>, vector<1x32xf32>
      %14 = vector.broadcast %13 : vector<1x32xf32> to vector<16x32xf32>
      %15 = arith.addf %12, %14 : vector<16x32xf32>
      %c0_14 = arith.constant 0 : index
      %c0_15 = arith.constant 0 : index
      %16 = vector.load %arg6[%c0_14, %c0_15] : memref<16x32xf32, #tpu.memory_space<vmem>>, vector<16x32xf32>
      %17 = arith.addf %15, %16 : vector<16x32xf32>
      %c0_16 = arith.constant 0 : index
      %c0_17 = arith.constant 0 : index
      %18 = vector.load %arg7[%c0_16, %c0_17] : memref<16x32xf32, #tpu.memory_space<vmem>>, vector<16x32xf32>
      tpu.vector_store %arg7[%c0_16, %c0_17], %17 {strides = array<i32>} : memref<16x32xf32, #tpu.memory_space<vmem>>, vector<16x32xf32>,
    } else {
    }
    return
  }
  func.func @transform_0(%arg0: i32, %arg1: i32, %arg2: i32) -> (i32, i32) {
    %c0_i32 = arith.constant 0 : i32
    return %arg0, %arg2 : i32, i32
  }
  func.func @transform_1(%arg0: i32, %arg1: i32, %arg2: i32) -> (i32, i32) {
    %c0_i32 = arith.constant 0 : i32
    return %arg2, %arg1 : i32, i32
  }
  func.func @transform_2(%arg0: i32, %arg1: i32, %arg2: i32) -> (i32, i32) {
    %c0_i32 = arith.constant 0 : i32
    %c0_i32_0 = arith.constant 0 : i32
    return %c0_i32, %arg1 : i32, i32
  }
  func.func @transform_3(%arg0: i32, %arg1: i32, %arg2: i32) -> (i32, i32) {
    %c0_i32 = arith.constant 0 : i32
    return %arg0, %arg1 : i32, i32
  }
  func.func @transform_4(%arg0: i32, %arg1: i32, %arg2: i32) -> (i32, i32) {
    %c0_i32 = arith.constant 0 : i32
    return %arg0, %arg1 : i32, i32
  }
}

</mosaic_0001>

<llo_original>
// kernel: vit_forward.9
$region0: #{vit_forward.9}
  #allocation0 [shape = 'u32[]', space=smem, size = 0x4, offset = 0x4, fixed_abs, tag = 'smem constant byte address 0x4 - core index']
  #allocation1 [shape = 'u32[144,128]{1,0:T(1,128)}', space=vmem, size = 0x12000, scoped, tag = 'internal scratch']
  %s0 = inlined_call_operand.vmem [shape: f32[8,256], index: 0, kind: input, shape index: {}]
  %s1 = inlined_call_operand.vmem [shape: bf16[256,32], index: 1, kind: input, shape index: {}]
  %s2 = inlined_call_operand.vmem [shape: f32[1,32], index: 2, kind: input, shape index: {}]
  %s3 = inlined_call_operand.vmem [shape: f32[8,32], index: 3, kind: output, shape index: {}]
  %s4 = sld [smem:[#allocation0]]
  $region30: #{vit_forward.9} parent=0
    _
  %s6 = ssub.s32 1, %s4
  %s7 = scalar_select 0, %s6, %s4
  // Predicated region
  $region2: #{vit_forward.9} parent=0 // pred_check
    _
  $region3: #{vit_forward.9} parent=0 // pred_check_branch
    %9 = sbr.rel (0) target = $region5
  $region4: #{vit_forward.9} parent=0 // pred_region
    _
  $region5: #{vit_forward.9} parent=0 // pred_fallthru
    _
  // Predicated region
  $region6: #{vit_forward.9} parent=0 // pred_check
    _
  $region7: #{vit_forward.9} parent=0 // pred_check_branch
    %11 = sbr.rel (0) target = $region9
  $region8: #{vit_forward.9} parent=0 // pred_region
    _
  $region9: #{vit_forward.9} parent=0 // pred_fallthru
    _
  // Predicated region
  $region10: #{vit_forward.9} parent=0 // pred_check
    _
  $region11: #{vit_forward.9} parent=0 // pred_check_branch
    %13 = sbr.rel (0) target = $region13
  $region12: #{vit_forward.9} parent=0 // pred_region
    _
  $region13: #{vit_forward.9} parent=0 // pred_fallthru
    _
  %p15 = scmp.eq.s32.totalorder 0, 0
  // Predicated region
  $region14: #{vit_forward.9} parent=0 // pred_check
    %p16 = pneg %p15
  $region15: #{vit_forward.9} parent=0 // pred_check_branch
    %18 = sbr.rel (%p16) target = $region17
  $region16: #{vit_forward.9} parent=0 // pred_region
    %vm19 = vcmask 261120
    %20 = vst.msk [vmem:[%s3] sm:$0xff] %vm19, 0.0
  $region17: #{vit_forward.9} parent=0 // pred_fallthru
    _
  %v21 = vld [vmem:[%s0] sm:$0xff]
  %v22 = vld [vmem:[%s0 + $0x8] sm:$0xff]
  %v23 = vpack.c.bf16 %v21, %v21
  %v24 = vpack.c.bf16 %v22, %v22
  %v25 = vld [vmem:[%s1] sm:$0xf]
  %v26 = vld [vmem:[%s1 + $0x4] sm:$0xf]
  %v27 = vld [vmem:[%s1 + $0x8] sm:$0xf]
  %v28 = vld [vmem:[%s1 + $0xc] sm:$0xf]
  %v29 = vld [vmem:[%s1 + $0x10] sm:$0xf]
  %v30 = vld [vmem:[%s1 + $0x14] sm:$0xf]
  %v31 = vld [vmem:[%s1 + $0x18] sm:$0xf]
  %v32 = vld [vmem:[%s1 + $0x1c] sm:$0xf]
  %v33 = vld [vmem:[%s1 + $0x20] sm:$0xf]
  %v34 = vld [vmem:[%s1 + $0x24] sm:$0xf]
  %v35 = vld [vmem:[%s1 + $0x28] sm:$0xf]
  %v36 = vld [vmem:[%s1 + $0x2c] sm:$0xf]
  %v37 = vld [vmem:[%s1 + $0x30] sm:$0xf]
  %v38 = vld [vmem:[%s1 + $0x34] sm:$0xf]
  %v39 = vld [vmem:[%s1 + $0x38] sm:$0xf]
  %v40 = vld [vmem:[%s1 + $0x3c] sm:$0xf]
  %v41 = vld [vmem:[%s1 + $0x40] sm:$0xf]
  %v42 = vld [vmem:[%s1 + $0x44] sm:$0xf]
  %v43 = vld [vmem:[%s1 + $0x48] sm:$0xf]
  %v44 = vld [vmem:[%s1 + $0x4c] sm:$0xf]
  %v45 = vld [vmem:[%s1 + $0x50] sm:$0xf]
  %v46 = vld [vmem:[%s1 + $0x54] sm:$0xf]
  %v47 = vld [vmem:[%s1 + $0x58] sm:$0xf]
  %v48 = vld [vmem:[%s1 + $0x5c] sm:$0xf]
  %v49 = vld [vmem:[%s1 + $0x60] sm:$0xf]
  %v50 = vld [vmem:[%s1 + $0x64] sm:$0xf]
  %v51 = vld [vmem:[%s1 + $0x68] sm:$0xf]
  %v52 = vld [vmem:[%s1 + $0x6c] sm:$0xf]
  %v53 = vld [vmem:[%s1 + $0x70] sm:$0xf]
  %v54 = vld [vmem:[%s1 + $0x74] sm:$0xf]
  %v55 = vld [vmem:[%s1 + $0x78] sm:$0xf]
  %v56 = vld [vmem:[%s1 + $0x7c] sm:$0xf]
  %v57 = vld [vmem:[%s3] sm:$0xff]
  %v90 = vunpack.c.l.b16 %v25
  %v91 = vunpack.c.l.b16 %v26
  %v92 = vunpack.c.l.b16 %v27
  %v93 = vunpack.c.l.b16 %v28
  %v94 = vunpack.c.l.b16 %v29
  %v95 = vunpack.c.l.b16 %v30
  %v96 = vunpack.c.l.b16 %v31
  %v97 = vunpack.c.l.b16 %v32
  %v98 = vunpack.c.l.b16 %v33
  %v99 = vunpack.c.l.b16 %v34
  %v100 = vunpack.c.l.b16 %v35
  %v101 = vunpack.c.l.b16 %v36
  %v102 = vunpack.c.l.b16 %v37
  %v103 = vunpack.c.l.b16 %v38
  %v104 = vunpack.c.l.b16 %v39
  %v105 = vunpack.c.l.b16 %v40
  %v106 = vunpack.c.l.b16 %v41
  %v107 = vunpack.c.l.b16 %v42
  %v108 = vunpack.c.l.b16 %v43
  %v109 = vunpack.c.l.b16 %v44
  %v110 = vunpack.c.l.b16 %v45
  %v111 = vunpack.c.l.b16 %v46
  %v112 = vunpack.c.l.b16 %v47
  %v113 = vunpack.c.l.b16 %v48
  %v114 = vunpack.c.l.b16 %v49
  %v115 = vunpack.c.l.b16 %v50
  %v116 = vunpack.c.l.b16 %v51
  %v117 = vunpack.c.l.b16 %v52
  %v118 = vunpack.c.l.b16 %v53
  %v119 = vunpack.c.l.b16 %v54
  %v120 = vunpack.c.l.b16 %v55
  %v121 = vunpack.c.l.b16 %v56
  %v122 = vpack.c.b16 %v91, %v90
  %v123 = vpack.c.b16 %v93, %v92
  %v124 = vpack.c.b16 %v95, %v94
  %v125 = vpack.c.b16 %v97, %v96
  %v126 = vpack.c.b16 %v99, %v98
  %v127 = vpack.c.b16 %v101, %v100
  %v128 = vpack.c.b16 %v103, %v102
  %v129 = vpack.c.b16 %v105, %v104
  %v130 = vpack.c.b16 %v107, %v106
  %v131 = vpack.c.b16 %v109, %v108
  %v132 = vpack.c.b16 %v111, %v110
  %v133 = vpack.c.b16 %v113, %v112
  %v134 = vpack.c.b16 %v115, %v114
  %v135 = vpack.c.b16 %v117, %v116
  %v136 = vpack.c.b16 %v119, %v118
  %v137 = vpack.c.b16 %v121, %v120
  %154 = vmatprep.subr.bf16.mxu0 0
  %155 = vmatpush1.bf16.msra.mxu0 %v129
  %156 = vmatprep.subr.bf16.mxu0 0
  %157 = vmatpush1.bf16.msra.mxu0 %v128
  %158 = vmatprep.subr.bf16.mxu0 0
  %159 = vmatpush1.bf16.msra.mxu0 %v127
  %160 = vmatprep.subr.bf16.mxu0 0
  %161 = vmatpush1.bf16.msra.mxu0 %v126
  %162 = vmatprep.subr.bf16.mxu0 0
  %163 = vmatpush1.bf16.msra.mxu0 %v125
  %164 = vmatprep.subr.bf16.mxu0 0
  %165 = vmatpush1.bf16.msra.mxu0 %v124
  %166 = vmatprep.subr.bf16.mxu0 0
  %167 = vmatpush1.bf16.msra.mxu0 %v123
  %168 = vmatprep.subr.bf16.mxu0 0
  %169 = vmatpush1.bf16.msra.mxu0 %v122
  %170 = vmatprep.subr.bf16.mxu0 0
  %171 = vmatpush2.bf16.msra.mxu0 %v137
  %172 = vmatprep.subr.bf16.mxu0 0
  %173 = vmatpush2.bf16.msra.mxu0 %v136
  %174 = vmatprep.subr.bf16.mxu0 0
  %175 = vmatpush2.bf16.msra.mxu0 %v135
  %176 = vmatprep.subr.bf16.mxu0 0
  %177 = vmatpush2.bf16.msra.mxu0 %v134
  %178 = vmatprep.subr.bf16.mxu0 0
  %179 = vmatpush2.bf16.msra.mxu0 %v133
  %180 = vmatprep.subr.bf16.mxu0 0
  %181 = vmatpush2.bf16.msra.mxu0 %v132
  %182 = vmatprep.subr.bf16.mxu0 0
  %183 = vmatpush2.bf16.msra.mxu0 %v131
  %184 = vmatprep.subr.bf16.mxu0 0
  %185 = vmatpush2.bf16.msra.mxu0 %v130
  %186 = vmatprep.mubr.bf16.mxu0 %v24
  %187 = vmatmul.mubr.bf16.gmra.mxu0 %v23
  %v188 = vpop.f32.mrf.mxu0
  %v189 = vadd.f32 0.0, %v188
  %v190 = vpop.f32.mrf.mxu0
  %v191 = vpop.f32.mrf.mxu0
  %v192 = vpop.f32.mrf.mxu0
  %193 = vdwg.mxu0
  %v194 = vadd.f32 %v57, %v189
  %vm195 = vcmask 261120
  %196 = vst.msk [vmem:[%s3] sm:$0xff] %vm195, %v194
  // Predicated region
  $region18: #{vit_forward.9} parent=0 // pred_check
    %p197 = pneg %p15
  $region19: #{vit_forward.9} parent=0 // pred_check_branch
    %199 = sbr.rel (%p197) target = $region21
  $region20: #{vit_forward.9} parent=0 // pred_region
    %v200 = vld [vmem:[%s3] sm:$0xff]
    %v201 = vld [vmem:[%s2] sm:$0x1]
    %v203 = vlaneseq
    %v204 = vshrl.u32 %v203, 7
    %v205 = vsub.s32 0, %v204
    %v206 = vrot.slane %v201, %v205
    %v208 = vadd.f32 %v200, %v206
    %209 = vst.msk [vmem:[%s3] sm:$0xff] %vm195, %v208
  $region21: #{vit_forward.9} parent=0 // pred_fallthru
    _
  // Predicated region
  $region22: #{vit_forward.9} parent=0 // pred_check
    _
  $region23: #{vit_forward.9} parent=0 // pred_check_branch
    %211 = sbr.rel (0) target = $region25
  $region24: #{vit_forward.9} parent=0 // pred_region
    _
  $region25: #{vit_forward.9} parent=0 // pred_fallthru
    _
  // Predicated region
  $region26: #{vit_forward.9} parent=0 // pred_check
    _
  $region27: #{vit_forward.9} parent=0 // pred_check_branch
    %213 = sbr.rel (0) target = $region29
  $region28: #{vit_forward.9} parent=0 // pred_region
    _
  $region29: #{vit_forward.9} parent=0 // pred_fallthru
    _

// kernel: vit_forward.10
$region0: #{vit_forward.10}
  #allocation0 [shape = 'u32[]', space=smem, size = 0x4, offset = 0x4, fixed_abs, tag = 'smem constant byte address 0x4 - core index']
  #allocation1 [shape = 'u32[144,128]{1,0:T(1,128)}', space=vmem, size = 0x12000, scoped, tag = 'internal scratch']
  #allocation2 [shape = 'f32[16,96]{1,0:T(8,128)}', space=vmem, size = 0x2000, scoped, tag = 'scratch operand']
  #allocation3 [shape = 'bf16[16,32]{1,0:T(8,128)(2,1)}', space=vmem, size = 0x1000, scoped, tag = 'scratch operand']
  %s0 = inlined_call_operand.vmem [shape: f32[16,32], index: 0, kind: input, shape index: {}]
  %s1 = inlined_call_operand.vmem [shape: bf16[32,96], index: 1, kind: input, shape index: {}]
  %s2 = inlined_call_operand.vmem [shape: f32[1,32], index: 2, kind: input, shape index: {}]
  %s3 = inlined_call_operand.vmem [shape: f32[1,32], index: 3, kind: input, shape index: {}]
  %s4 = inlined_call_operand.vmem [shape: bf16[16,96], index: 4, kind: output, shape index: {}]
  %s5 = sld [smem:[#allocation0]]
  $region38: #{vit_forward.10} parent=0
    _
  %s7 = ssub.s32 1, %s5
  %s8 = scalar_select 0, %s7, %s5
  // Predicated region
  $region2: #{vit_forward.10} parent=0 // pred_check
    _
  $region3: #{vit_forward.10} parent=0 // pred_check_branch
    %10 = sbr.rel (0) target = $region5
  $region4: #{vit_forward.10} parent=0 // pred_region
    _
  $region5: #{vit_forward.10} parent=0 // pred_fallthru
    _
  // Predicated region
  $region6: #{vit_forward.10} parent=0 // pred_check
    _
  $region7: #{vit_forward.10} parent=0 // pred_check_branch
    %12 = sbr.rel (0) target = $region9
  $region8: #{vit_forward.10} parent=0 // pred_region
    _
  $region9: #{vit_forward.10} parent=0 // pred_fallthru
    _
  // Predicated region
  $region10: #{vit_forward.10} parent=0 // pred_check
    _
  $region11: #{vit_forward.10} parent=0 // pred_check_branch
    %14 = sbr.rel (0) target = $region13
  $region12: #{vit_forward.10} parent=0 // pred_region
    _
  $region13: #{vit_forward.10} parent=0 // pred_fallthru
    _
  // Predicated region
  $region14: #{vit_forward.10} parent=0 // pred_check
    _
  $region15: #{vit_forward.10} parent=0 // pred_check_branch
    %16 = sbr.rel (0) target = $region17
  $region16: #{vit_forward.10} parent=0 // pred_region
    _
  $region17: #{vit_forward.10} parent=0 // pred_fallthru
    _
  %p18 = scmp.eq.s32.totalorder 0, 0
  // Predicated region
  $region18: #{vit_forward.10} parent=0 // pred_check
    %p19 = pneg %p18
  $region19: #{vit_forward.10} parent=0 // pred_check_branch
    %21 = sbr.rel (%p19) target = $region21
  $region20: #{vit_forward.10} parent=0 // pred_region
    %vm22 = vcmask 785408
    %23 = vst.msk [vmem:[#allocation2] sm:$0xff] %vm22, 0.0
    %24 = vst.msk [vmem:[#allocation2 + $0x8] sm:$0xff] %vm22, 0.0
  $region21: #{vit_forward.10} parent=0 // pred_fallthru
    _
  %p25 = scmp.eq.s32.totalorder 0, 0
  // Predicated region
  $region22: #{vit_forward.10} parent=0 // pred_check
    %p26 = pneg %p25
  $region23: #{vit_forward.10} parent=0 // pred_check_branch
    %28 = sbr.rel (%p26) target = $region25
  $region24: #{vit_forward.10} parent=0 // pred_region
    %v29 = vld [vmem:[%s0] sm:$0xff]
    %v30 = vld [vmem:[%s0 + $0x8] sm:$0xff]
    %vm31 = vcmask 261120
    %v32 = vsel %vm31, %v29, 0.0
    %33 = vadd.xlane.f32.xlu0 %v32
    %v34 = vpop.xlane.xlu0 %33
    %v35 = vsel %vm31, %v30, 0.0
    %36 = vadd.xlane.f32.xlu0 %v35
    %v37 = vpop.xlane.xlu0 %36
    %v38 = vrcp.pop 32.0
    %v39 = vmul.f32 %v34, %v38
    %v40 = vmul.f32 %v37, %v38
    %v41 = vsub.f32 %v29, %v39
    %v42 = vsub.f32 %v30, %v40
    %v43 = vmul.f32 %v41, %v41
    %v44 = vmul.f32 %v42, %v42
    %v45 = vsel %vm31, %v43, 0.0
    %46 = vadd.xlane.f32.xlu0 %v45
    %v47 = vpop.xlane.xlu0 %46
    %v48 = vsel %vm31, %v44, 0.0
    %49 = vadd.xlane.f32.xlu0 %v48
    %v50 = vpop.xlane.xlu0 %49
    %v51 = vmul.f32 %v47, %v38
    %v52 = vmul.f32 %v50, %v38
    %v53 = vadd.f32 %v51, 1e-05
    %v54 = vadd.f32 %v52, 1e-05
    %v55 = vrsqrt.pop %v53
    %v56 = vrsqrt.pop %v54
    %v57 = vmul.f32 %v41, %v55
    %v58 = vmul.f32 %v42, %v56
    %v59 = vld [vmem:[%s2] sm:$0x1]
    %v61 = vlaneseq
    %v62 = vshrl.u32 %v61, 7
    %v63 = vsub.s32 0, %v62
    %v64 = vrot.slane %v59, %v63
    %v66 = vmul.f32 %v57, %v64
    %v67 = vmul.f32 %v58, %v64
    %v68 = vld [vmem:[%s3] sm:$0x1]
    %v70 = vlaneseq
    %v71 = vshrl.u32 %v70, 7
    %v72 = vsub.s32 0, %v71
    %v73 = vrot.slane %v68, %v72
    %v75 = vadd.f32 %v66, %v73
    %v76 = vadd.f32 %v67, %v73
    %v77 = vpack.c.bf16 %v76, %v75
    %v79 = vunpack.c.l.b16 %v77
    %v80 = vunpack.c.h.b16 %v77
    %v81 = vpack.c.b16 %v79, %v79
    %v82 = vpack.c.b16 %v80, %v80
    %vm85 = vcmask 257024
    %86 = vst.msk [vmem:[#allocation3] sm:$0xf] %vm85, %v81
    %87 = vst.msk [vmem:[#allocation3 + $0x4] sm:$0xf] %vm85, %v82
  $region25: #{vit_forward.10} parent=0 // pred_fallthru
    _
  %v88 = vld [vmem:[#allocation3] sm:$0xf]
  %v89 = vld [vmem:[#allocation3 + $0x4] sm:$0xf]
  %v90 = vld [vmem:[%s1] sm:$0xf]
  %v91 = vld [vmem:[%s1 + $0x4] sm:$0xf]
  %v92 = vld [vmem:[%s1 + $0x8] sm:$0xf]
  %v93 = vld [vmem:[%s1 + $0xc] sm:$0xf]
  %v94 = vld [vmem:[#allocation2] sm:$0xff]
  %v95 = vld [vmem:[#allocation2 + $0x8] sm:$0xff]
  %v98 = vunpack.c.l.b16 %v88
  %v99 = vunpack.c.l.b16 %v89
  %v100 = vpack.c.b16 %v99, %v98
  %v105 = vunpack.c.l.b16 %v90
  %v106 = vunpack.c.l.b16 %v91
  %v107 = vunpack.c.l.b16 %v92
  %v108 = vunpack.c.l.b16 %v93
  %v109 = vpack.c.b16 %v106, %v105
  %v110 = vpack.c.b16 %v108, %v107
  %vm113 = vcmask 261120
  %v115 = vsel %vm113, %v100, 0
  %117 = vmatprep.subr.bf16.mxu0 0
  %118 = vmatpush1.bf16.msra.mxu0 0
  %119 = vmatprep.subr.bf16.mxu0 0
  %120 = vmatpush1.bf16.msra.mxu0 0
  %121 = vmatprep.subr.bf16.mxu0 0
  %122 = vmatpush1.bf16.msra.mxu0 0
  %123 = vmatprep.subr.bf16.mxu0 0
  %124 = vmatpush1.bf16.msra.mxu0 0
  %125 = vmatprep.subr.bf16.mxu0 0
  %126 = vmatpush1.bf16.msra.mxu0 0
  %127 = vmatprep.subr.bf16.mxu0 0
  %128 = vmatpush1.bf16.msra.mxu0 0
  %129 = vmatprep.subr.bf16.mxu0 0
  %130 = vmatpush1.bf16.msra.mxu0 %v110
  %131 = vmatprep.subr.bf16.mxu0 0
  %132 = vmatpush1.bf16.msra.mxu0 %v109
  %133 = vmatprep.subr.bf16.mxu0 0
  %134 = vmatpush2.bf16.msra.mxu0 0
  %135 = vmatprep.subr.bf16.mxu0 0
  %136 = vmatpush2.bf16.msra.mxu0 0
  %137 = vmatprep.subr.bf16.mxu0 0
  %138 = vmatpush2.bf16.msra.mxu0 0
  %139 = vmatprep.subr.bf16.mxu0 0
  %140 = vmatpush2.bf16.msra.mxu0 0
  %141 = vmatprep.subr.bf16.mxu0 0
  %142 = vmatpush2.bf16.msra.mxu0 0
  %143 = vmatprep.subr.bf16.mxu0 0
  %144 = vmatpush2.bf16.msra.mxu0 0
  %145 = vmatprep.subr.bf16.mxu0 0
  %146 = vmatpush2.bf16.msra.mxu0 0
  %147 = vmatprep.subr.bf16.mxu0 0
  %148 = vmatpush2.bf16.msra.mxu0 0
  %149 = vmatprep.mubr.bf16.mxu0 0
  %150 = vmatmul.mubr.bf16.gmra.mxu0 %v115
  %v151 = vpop.f32.mrf.mxu0
  %v152 = vadd.f32 0.0, %v151
  %v153 = vpop.f32.mrf.mxu0
  %v154 = vpop.f32.mrf.mxu0
  %v155 = vadd.f32 0.0, %v154
  %v156 = vpop.f32.mrf.mxu0
  %157 = vdwg.mxu0
  %v158 = vadd.f32 %v94, %v152
  %v159 = vadd.f32 %v95, %v155
  %vm160 = vcmask 785408
  %161 = vst.msk [vmem:[#allocation2] sm:$0xff] %vm160, %v158
  %162 = vst.msk [vmem:[#allocation2 + $0x8] sm:$0xff] %vm160, %v159
  // Predicated region
  $region26: #{vit_forward.10} parent=0 // pred_check
    %p163 = pneg %p18
  $region27: #{vit_forward.10} parent=0 // pred_check_branch
    %165 = sbr.rel (%p163) target = $region29
  $region28: #{vit_forward.10} parent=0 // pred_region
    %v166 = vld [vmem:[#allocation2] sm:$0xff]
    %v167 = vld [vmem:[#allocation2 + $0x8] sm:$0xff]
    %v168 = vpack.c.bf16 %v167, %v166
    %v170 = vunpack.c.l.b16 %v168
    %v171 = vunpack.c.h.b16 %v168
    %v172 = vpack.c.b16 %v170, %v170
    %v173 = vpack.c.b16 %v171, %v171
    %vm176 = vcmask 781312
    %177 = vst.msk [vmem:[%s4] sm:$0xf] %vm176, %v172
    %178 = vst.msk [vmem:[%s4 + $0x4] sm:$0xf] %vm176, %v173
  $region29: #{vit_forward.10} parent=0 // pred_fallthru
    _
  // Predicated region
  $region30: #{vit_forward.10} parent=0 // pred_check
    _
  $region31: #{vit_forward.10} parent=0 // pred_check_branch
    %180 = sbr.rel (0) target = $region33
  $region32: #{vit_forward.10} parent=0 // pred_region
    _
  $region33: #{vit_forward.10} parent=0 // pred_fallthru
    _
  // Predicated region
  $region34: #{vit_forward.10} parent=0 // pred_check
    _
  $region35: #{vit_forward.10} parent=0 // pred_check_branch
    %182 = sbr.rel (0) target = $region37
  $region36: #{vit_forward.10} parent=0 // pred_region
    _
  $region37: #{vit_forward.10} parent=0 // pred_fallthru
    _

// kernel: vit_forward.11
$region0: #{vit_forward.11}
  #allocation0 [shape = 'u32[]', space=smem, size = 0x4, offset = 0x4, fixed_abs, tag = 'smem constant byte address 0x4 - core index']
  #allocation1 [shape = 'u32[144,128]{1,0:T(1,128)}', space=vmem, size = 0x12000, scoped, tag = 'internal scratch']
  %s0 = inlined_call_operand.vmem [shape: bf16[2,8,96], index: 0, kind: input, shape index: {}]
  %s1 = inlined_call_operand.vmem [shape: bf16[32,32], index: 1, kind: input, shape index: {}]
  %s2 = inlined_call_operand.vmem [shape: f32[1,32], index: 2, kind: input, shape index: {}]
  %s3 = inlined_call_operand.vmem [shape: f32[2,8,32], index: 3, kind: input, shape index: {}]
  %s4 = inlined_call_operand.vmem [shape: f32[2,8,32], index: 4, kind: output, shape index: {}]
  %s5 = sld [smem:[#allocation0]]
  $region49: #{vit_forward.11} parent=0
    _
  %s7 = ssub.s32 1, %s5
  %s8 = scalar_select 0, %s7, %s5
  loop: start=0, step=1, limit=4
  $region2: #{vit_forward.11} parent=0 // loop_pre_header
    _
  $region3: #{vit_forward.11} parent=0 // loop_header
    %s10 = sphi 0, %s14
    %p11 = scmp.ge.s32.totalorder %s10, 4
    %s17 = sphi 0, %s29
    %s18 = sphi 0, %s25
    %s19 = sphi 0, %s17
    %s20 = sphi 0, %s18
    %s21 = sphi 0, %s19
    %s22 = sphi 0, %s20
    %s32 = sphi 0, %s34
    %s35 = sphi 0, %s32
    %s36 = sphi 0, %s35
    %s52 = sphi 0, %s36
    %s56 = sphi 0, %s56
    %s58 = sphi 0, %s56
    %s59 = sphi 0, %s58
    %s73 = sphi 0, %s59
    %s77 = sphi 0, %s77
    %s79 = sphi 0, %s77
    %s80 = sphi 0, %s79
    %s94 = sphi 0, %s80
    %s102 = sphi 0, %s104
    %s105 = sphi 0, %s102
    %s106 = sphi 0, %s105
    %s122 = sphi 0, %s106
    %s130 = sphi 0, %s132
    %s133 = sphi 0, %s130
    %s134 = sphi 0, %s133
    %s150 = sphi 0, %s134
  $region4: #{vit_forward.11} parent=0 // loop_header_branch
    %13 = sbr.rel (%p11) target = $region8
  $region5: #{vit_forward.11} parent=0 // loop_body
    %s15 = ssub.s32 %s10, 1
    %s16 = ssub.s32 %s10, 2
    %s23 = sadd.s32 1, %s18
    %p24 = scmp.ge.s32.totalorder %s23, 1
    %s25 = scalar_select %p24, 0, %s23
    %s26 = sadd.s32 1, %s17
    %s27 = scalar_select %p24, %s26, %s17
    %p28 = scmp.ge.s32.totalorder %s27, 2
    %s29 = scalar_select %p28, 0, %s27
    %s30 = ssub.s32 %s17, %s29
    %p31 = scmp.eq.s32.totalorder %s30, 0
    %s33 = sadd.s32 %s32, 1
    %s34 = scalar_select %p31, %s32, %s33
    %p37 = pneg %p31
    %p38 = scmp.eq.s32.totalorder %s10, 1
    %p39 = por %p37, %p38
    %p40 = scmp.ne.s32.totalorder %s32, %s35
    %p41 = scmp.eq.s32.totalorder %s10, 0
    %p42 = por %p40, %p41
    %p43 = scmp.ne.s32.totalorder %s32, %s35
    %p44 = scmp.eq.s32.totalorder %s15, 1
    %p45 = por %p43, %p44
    %p46 = scmp.ne.s32.totalorder %s35, %s36
    %p47 = scmp.eq.s32.totalorder %s15, 0
    %p48 = por %p46, %p47
    %p49 = scmp.ne.s32.totalorder %s35, %s36
    %p50 = scmp.eq.s32.totalorder %s16, 1
    %p51 = por %p49, %p50
    %p53 = scmp.ne.s32.totalorder %s36, %s52
    %p54 = scmp.eq.s32.totalorder %s16, 0
    %p55 = por %p53, %p54
    %s57 = sadd.s32 %s56, 1
    %p60 = scmp.eq.s32.totalorder %s10, 1
    %p61 = scmp.ne.s32.totalorder %s56, %s58
    %p62 = scmp.eq.s32.totalorder %s10, 0
    %p63 = por %p61, %p62
    %p64 = scmp.ne.s32.totalorder %s56, %s58
    %p65 = scmp.eq.s32.totalorder %s15, 1
    %p66 = por %p64, %p65
    %p67 = scmp.ne.s32.totalorder %s58, %s59
    %p68 = scmp.eq.s32.totalorder %s15, 0
    %p69 = por %p67, %p68
    %p70 = scmp.ne.s32.totalorder %s58, %s59
    %p71 = scmp.eq.s32.totalorder %s16, 1
    %p72 = por %p70, %p71
    %p74 = scmp.ne.s32.totalorder %s59, %s73
    %p75 = scmp.eq.s32.totalorder %s16, 0
    %p76 = por %p74, %p75
    %s78 = sadd.s32 %s77, 1
    %p81 = scmp.eq.s32.totalorder %s10, 1
    %p82 = scmp.ne.s32.totalorder %s77, %s79
    %p83 = scmp.eq.s32.totalorder %s10, 0
    %p84 = por %p82, %p83
    %p85 = scmp.ne.s32.totalorder %s77, %s79
    %p86 = scmp.eq.s32.totalorder %s15, 1
    %p87 = por %p85, %p86
    %p88 = scmp.ne.s32.totalorder %s79, %s80
    %p89 = scmp.eq.s32.totalorder %s15, 0
    %p90 = por %p88, %p89
    %p91 = scmp.ne.s32.totalorder %s79, %s80
    %p92 = scmp.eq.s32.totalorder %s16, 1
    %p93 = por %p91, %p92
    %p95 = scmp.ne.s32.totalorder %s80, %s94
    %p96 = scmp.eq.s32.totalorder %s16, 0
    %p97 = por %p95, %p96
    %s98 = ssub.s32 %s17, %s29
    %s99 = ssub.s32 %s18, %s25
    %s100 = sor.u32 %s98, %s99
    %p101 = scmp.eq.s32.totalorder %s100, 0
    %s103 = sadd.s32 %s102, 1
    %s104 = scalar_select %p101, %s102, %s103
    %p107 = pneg %p101
    %p108 = scmp.eq.s32.totalorder %s10, 1
    %p109 = por %p107, %p108
    %p110 = scmp.ne.s32.totalorder %s102, %s105
    %p111 = scmp.eq.s32.totalorder %s10, 0
    %p112 = por %p110, %p111
    %p113 = scmp.ne.s32.totalorder %s102, %s105
    %p114 = scmp.eq.s32.totalorder %s15, 1
    %p115 = por %p113, %p114
    %p116 = scmp.ne.s32.totalorder %s105, %s106
    %p117 = scmp.eq.s32.totalorder %s15, 0
    %p118 = por %p116, %p117
    %p119 = scmp.ne.s32.totalorder %s105, %s106
    %p120 = scmp.eq.s32.totalorder %s16, 1
    %p121 = por %p119, %p120
    %p123 = scmp.ne.s32.totalorder %s106, %s122
    %p124 = scmp.eq.s32.totalorder %s16, 0
    %p125 = por %p123, %p124
    %s126 = ssub.s32 %s17, %s29
    %s127 = ssub.s32 %s18, %s25
    %s128 = sor.u32 %s126, %s127
    %p129 = scmp.eq.s32.totalorder %s128, 0
    %s131 = sadd.s32 %s130, 1
    %s132 = scalar_select %p129, %s130, %s131
    %p135 = pneg %p129
    %p136 = scmp.eq.s32.totalorder %s10, 1
    %p137 = por %p135, %p136
    %p138 = scmp.ne.s32.totalorder %s130, %s133
    %p139 = scmp.eq.s32.totalorder %s10, 0
    %p140 = por %p138, %p139
    %p141 = scmp.ne.s32.totalorder %s130, %s133
    %p142 = scmp.eq.s32.totalorder %s15, 1
    %p143 = por %p141, %p142
    %p144 = scmp.ne.s32.totalorder %s133, %s134
    %p145 = scmp.eq.s32.totalorder %s15, 0
    %p146 = por %p144, %p145
    %p147 = scmp.ne.s32.totalorder %s133, %s134
    %p148 = scmp.eq.s32.totalorder %s16, 1
    %p149 = por %p147, %p148
    %p151 = scmp.ne.s32.totalorder %s134, %s150
    %p152 = scmp.eq.s32.totalorder %s16, 0
    %p153 = por %p151, %p152
    %p154 = scmp.le.s32.totalorder 1, %s10
    %p155 = scmp.lt.s32.totalorder %s10, 3
    %p156 = pnand %p154, %p155
    %p157 = pneg %p156
    // Predicated region
    $region9: #{vit_forward.11} parent=5 // pred_check
      _
    $region10: #{vit_forward.11} parent=5 // pred_check_branch
      %159 = sbr.rel (%p156) target = $region12
    $region11: #{vit_forward.11} parent=5 // pred_region
      %s160 = ssub.s32 %s10, 1
      // Predicated region
      $region13: #{vit_forward.11} parent=11 // pred_check
        %p161 = pneg %p69
      $region14: #{vit_forward.11} parent=11 // pred_check_branch
        %163 = sbr.rel (%p161) target = $region16
      $region15: #{vit_forward.11} parent=11 // pred_region
        _
      $region16: #{vit_forward.11} parent=11 // pred_fallthru
        _
      // Predicated region
      $region17: #{vit_forward.11} parent=11 // pred_check
        %p164 = pneg %p90
      $region18: #{vit_forward.11} parent=11 // pred_check_branch
        %166 = sbr.rel (%p164) target = $region20
      $region19: #{vit_forward.11} parent=11 // pred_region
        _
      $region20: #{vit_forward.11} parent=11 // pred_fallthru
        _
    $region12: #{vit_forward.11} parent=5 // pred_fallthru
      _
    %p167 = scmp.lt.s32.totalorder %s10, 2
    // Predicated region
    $region21: #{vit_forward.11} parent=5 // pred_check
      %p168 = pneg %p167
    $region22: #{vit_forward.11} parent=5 // pred_check_branch
      %170 = sbr.rel (%p168) target = $region24
    $region23: #{vit_forward.11} parent=5 // pred_region
      // Predicated region
      $region25: #{vit_forward.11} parent=23 // pred_check
        %p171 = pneg %p42
      $region26: #{vit_forward.11} parent=23 // pred_check_branch
        %173 = sbr.rel (%p171) target = $region28
      $region27: #{vit_forward.11} parent=23 // pred_region
        %p174 = scmp.lt.s32.totalorder %s17, 1
        %s175 = scalar_select %p174, %s17, 1
        %s176 = smul.addr %s175, 4
        %s177 = scalar_lea.vmem %s0, %s176
      $region28: #{vit_forward.11} parent=23 // pred_fallthru
        _
      // Predicated region
      $region29: #{vit_forward.11} parent=23 // pred_check
        %p178 = pneg %p112
      $region30: #{vit_forward.11} parent=23 // pred_check_branch
        %180 = sbr.rel (%p178) target = $region32
      $region31: #{vit_forward.11} parent=23 // pred_region
        %p181 = scmp.lt.s32.totalorder %s17, 1
        %s182 = scalar_select %p181, %s17, 1
        %p183 = scmp.lt.s32.totalorder %s18, 0
        %s184 = scalar_select %p183, %s18, 0
        %s185 = sadd.s32 %s184, %s182
        %s186 = smul.addr %s185, 8
        %s187 = scalar_lea.vmem %s3, %s186
      $region32: #{vit_forward.11} parent=23 // pred_fallthru
        _
    $region24: #{vit_forward.11} parent=5 // pred_fallthru
      _
    %p188 = scmp.le.s32.totalorder 1, %s10
    %p189 = scmp.lt.s32.totalorder %s10, 3
    %p190 = pnand %p188, %p189
    %p191 = pneg %p190
    // Predicated region
    $region33: #{vit_forward.11} parent=5 // pred_check
      _
    $region34: #{vit_forward.11} parent=5 // pred_check_branch
      %193 = sbr.rel (%p190) target = $region36
    $region35: #{vit_forward.11} parent=5 // pred_region
      %s194 = ssub.s32 %s10, 1
      %p195 = scmp.lt.s32.totalorder %s19, 1
      %s196 = scalar_select %p195, %s19, 1
      %s197 = smul.addr %s196, 4
      %s198 = scalar_lea.vmem %s0, %s197
      %p199 = pneg %p48
      %p200 = pneg %p45
      %p201 = pneg %p69
      %p202 = pneg %p66
      %p203 = pneg %p90
      %p204 = pneg %p87
      %p205 = scmp.lt.s32.totalorder %s19, 1
      %s206 = scalar_select %p205, %s19, 1
      %p207 = scmp.lt.s32.totalorder %s20, 0
      %s208 = scalar_select %p207, %s20, 0
      %s209 = sadd.s32 %s208, %s206
      %s210 = smul.addr %s209, 8
      %s211 = scalar_lea.vmem %s3, %s210
      %p212 = pneg %p118
      %p213 = pneg %p115
      %p214 = pneg %p146
      %p215 = pneg %p143
      %p216 = scmp.lt.s32.totalorder %s19, 1
      %s217 = scalar_select %p216, %s19, 1
      %p218 = scmp.lt.s32.totalorder %s20, 0
      %s219 = scalar_select %p218, %s20, 0
      %s220 = sadd.s32 %s219, %s217
      %s221 = smul.addr %s220, 8
      %s222 = scalar_lea.vmem %s4, %s221
      %p223 = scmp.lt.s32.totalorder %s19, 1
      %s224 = scalar_select %p223, %s19, 1
      %s225 = smul.addr %s224, 4
      %s226 = scalar_lea.vmem %s0, %s225
      %p227 = scmp.lt.s32.totalorder %s19, 1
      %s228 = scalar_select %p227, %s19, 1
      %p229 = scmp.lt.s32.totalorder %s20, 0
      %s230 = scalar_select %p229, %s20, 0
      %s231 = sadd.s32 %s230, %s228
      %s232 = smul.addr %s231, 8
      %s233 = scalar_lea.vmem %s3, %s232
      %p234 = scmp.lt.s32.totalorder %s19, 1
      %s235 = scalar_select %p234, %s19, 1
      %p236 = scmp.lt.s32.totalorder %s20, 0
      %s237 = scalar_select %p236, %s20, 0
      %s238 = sadd.s32 %s237, %s235
      %s239 = smul.addr %s238, 8
      %s240 = scalar_lea.vmem %s4, %s239
      %v242 = vld [vmem:[%s226] sm:$0xf]
      %v243 = vlaneseq
      %v244 = vand.u32 %v243, 127
      %vm245 = vcmp.lt.s32.totalorder %v244, 5
      %v246 = vld [vmem:[%s233] sm:$0xff]
      %v247 = vld [vmem:[%s2] sm:$0x1]
      %v249 = vlaneseq
      %v250 = vshrl.u32 %v249, 7
      %v251 = vsub.s32 0, %v250
      %v252 = vrot.slane %v247, %v251
      %v254 = vadd.f32 %v246, %v252
      %v256 = vunpack.c.l.b16 %v242
      %v257 = vpack.c.b16 %v256, %v256
      %258 = vrot.lane.b32.xlu0 %v257, 96
      %v259 = vpop.permute.xlu0 %258
      %vm260 = vcmask 64512
      %v262 = vsel %vm260, %v242, 0
      %v265 = vsel %vm260, %v259, 0
      %267 = vmatprep.subr.bf16.mxu0 0
      %268 = vmatpush1.bf16.xpose.msra.mxu0 0
      %269 = vmatprep.subr.bf16.mxu0 0
      %270 = vmatpush1.bf16.xpose.msra.mxu0 0
      %271 = vmatprep.subr.bf16.mxu0 0
      %272 = vmatpush1.bf16.xpose.msra.mxu0 0
      %273 = vmatprep.subr.bf16.mxu0 0
      %274 = vmatpush1.bf16.xpose.msra.mxu0 0
      %275 = vmatprep.subr.bf16.mxu0 0
      %276 = vmatpush1.bf16.xpose.msra.mxu0 0
      %277 = vmatprep.subr.bf16.mxu0 0
      %278 = vmatpush1.bf16.xpose.msra.mxu0 0
      %279 = vmatprep.subr.bf16.mxu0 0
      %280 = vmatpush1.bf16.xpose.msra.mxu0 0
      %281 = vmatprep.subr.bf16.mxu0 0
      %282 = vmatpush1.bf16.xpose.msra.mxu0 %v265
      %283 = vmatprep.subr.bf16.mxu0 0
      %284 = vmatpush2.bf16.xpose.msra.mxu0 0
      %285 = vmatprep.subr.bf16.mxu0 0
      %286 = vmatpush2.bf16.xpose.msra.mxu0 0
      %287 = vmatprep.subr.bf16.mxu0 0
      %288 = vmatpush2.bf16.xpose.msra.mxu0 0
      %289 = vmatprep.subr.bf16.mxu0 0
      %290 = vmatpush2.bf16.xpose.msra.mxu0 0
      %291 = vmatprep.subr.bf16.mxu0 0
      %292 = vmatpush2.bf16.xpose.msra.mxu0 0
      %293 = vmatprep.subr.bf16.mxu0 0
      %294 = vmatpush2.bf16.xpose.msra.mxu0 0
      %295 = vmatprep.subr.bf16.mxu0 0
      %296 = vmatpush2.bf16.xpose.msra.mxu0 0
      %297 = vmatprep.subr.bf16.mxu0 0
      %298 = vmatpush2.bf16.xpose.msra.mxu0 0
      %299 = vmatprep.mubr.bf16.mxu0 0
      %300 = vmatmul.mubr.bf16.gmra.mxu0 %v262
      %v301 = vpop.f32.mrf.mxu0
      %v302 = vadd.f32 0.0, %v301
      %v303 = vpop.f32.mrf.mxu0
      %v304 = vpop.f32.mrf.mxu0
      %v305 = vpop.f32.mrf.mxu0
      %306 = vdwg.mxu0
      %v307 = vmul.f32 %v302, 0.35355338
      %v308 = vsel %vm245, %v307, -1e+30
      %v309 = vsel %vm260, %v308, -inf
      %310 = vmax.xlane.f32.xlu0 %v309
      %v311 = vpop.xlane.xlu0 %310
      %v312 = vsub.f32 %v308, %v311
      %v313 = vmul.f32 %v312, 1.442695
      %v314 = vpow.pop %v313
      %v315 = vsel %vm260, %v314, 0.0
      %316 = vadd.xlane.f32.xlu0 %v315
      %v317 = vpop.xlane.xlu0 %316
      %v318 = vrcp.pop %v317
      %v319 = vmul.f32 %v314, %v318
      %v320 = vpack.c.bf16 %v319, %v319
      %321 = vrot.lane.b32.xlu0 %v257, 64
      %v322 = vpop.permute.xlu0 %321
      %v324 = vsel %vm260, %v320, 0
      %vm326 = vcmask 1043456
      %v328 = vsel %vm326, %v322, 0
      %330 = vmatprep.subr.bf16.mxu0 0
      %331 = vmatpush1.bf16.msra.mxu0 0
      %332 = vmatprep.subr.bf16.mxu0 0
      %333 = vmatpush1.bf16.msra.mxu0 0
      %334 = vmatprep.subr.bf16.mxu0 0
      %335 = vmatpush1.bf16.msra.mxu0 0
      %336 = vmatprep.subr.bf16.mxu0 0
      %337 = vmatpush1.bf16.msra.mxu0 0
      %338 = vmatprep.subr.bf16.mxu0 0
      %339 = vmatpush1.bf16.msra.mxu0 0
      %340 = vmatprep.subr.bf16.mxu0 0
      %341 = vmatpush1.bf16.msra.mxu0 0
      %342 = vmatprep.subr.bf16.mxu0 0
      %343 = vmatpush1.bf16.msra.mxu0 0
      %344 = vmatprep.subr.bf16.mxu0 0
      %345 = vmatpush1.bf16.msra.mxu0 %v328
      %346 = vmatprep.subr.bf16.mxu0 0
      %347 = vmatpush2.bf16.msra.mxu0 0
      %348 = vmatprep.subr.bf16.mxu0 0
      %349 = vmatpush2.bf16.msra.mxu0 0
      %350 = vmatprep.subr.bf16.mxu0 0
      %351 = vmatpush2.bf16.msra.mxu0 0
      %352 = vmatprep.subr.bf16.mxu0 0
      %353 = vmatpush2.bf16.msra.mxu0 0
      %354 = vmatprep.subr.bf16.mxu0 0
      %355 = vmatpush2.bf16.msra.mxu0 0
      %356 = vmatprep.subr.bf16.mxu0 0
      %357 = vmatpush2.bf16.msra.mxu0 0
      %358 = vmatprep.subr.bf16.mxu0 0
      %359 = vmatpush2.bf16.msra.mxu0 0
      %360 = vmatprep.subr.bf16.mxu0 0
      %361 = vmatpush2.bf16.msra.mxu0 0
      %362 = vmatprep.mubr.bf16.mxu0 0
      %363 = vmatmul.mubr.bf16.gmra.mxu0 %v324
      %v364 = vpop.f32.mrf.mxu0
      %v365 = vadd.f32 0.0, %v364
      %v366 = vpop.f32.mrf.mxu0
      %v367 = vpop.f32.mrf.mxu0
      %v368 = vpop.f32.mrf.mxu0
      %369 = vdwg.mxu0
      %v370 = vld [vmem:[%s1] sm:$0xf]
      %v371 = vpack.c.bf16 %v365, %v365
      %v373 = vsel %vm260, %v371, 0
      %v376 = vsel %vm326, %v370, 0
      %378 = vmatprep.subr.bf16.mxu0 0
      %379 = vmatpush1.bf16.msra.mxu0 0
      %380 = vmatprep.subr.bf16.mxu0 0
      %381 = vmatpush1.bf16.msra.mxu0 0
      %382 = vmatprep.subr.bf16.mxu0 0
      %383 = vmatpush1.bf16.msra.mxu0 0
      %384 = vmatprep.subr.bf16.mxu0 0
      %385 = vmatpush1.bf16.msra.mxu0 0
      %386 = vmatprep.subr.bf16.mxu0 0
      %387 = vmatpush1.bf16.msra.mxu0 0
      %388 = vmatprep.subr.bf16.mxu0 0
      %389 = vmatpush1.bf16.msra.mxu0 0
      %390 = vmatprep.subr.bf16.mxu0 0
      %391 = vmatpush1.bf16.msra.mxu0 0
      %392 = vmatprep.subr.bf16.mxu0 0
      %393 = vmatpush1.bf16.msra.mxu0 %v376
      %394 = vmatprep.subr.bf16.mxu0 0
      %395 = vmatpush2.bf16.msra.mxu0 0
      %396 = vmatprep.subr.bf16.mxu0 0
      %397 = vmatpush2.bf16.msra.mxu0 0
      %398 = vmatprep.subr.bf16.mxu0 0
      %399 = vmatpush2.bf16.msra.mxu0 0
      %400 = vmatprep.subr.bf16.mxu0 0
      %401 = vmatpush2.bf16.msra.mxu0 0
      %402 = vmatprep.subr.bf16.mxu0 0
      %403 = vmatpush2.bf16.msra.mxu0 0
      %404 = vmatprep.subr.bf16.mxu0 0
      %405 = vmatpush2.bf16.msra.mxu0 0
      %406 = vmatprep.subr.bf16.mxu0 0
      %407 = vmatpush2.bf16.msra.mxu0 0
      %408 = vmatprep.subr.bf16.mxu0 0
      %409 = vmatpush2.bf16.msra.mxu0 0
      %410 = vmatprep.mubr.bf16.mxu0 0
      %411 = vmatmul.mubr.bf16.gmra.mxu0 %v373
      %v412 = vpop.f32.mrf.mxu0
      %v413 = vadd.f32 0.0, %v412
      %v414 = vpop.f32.mrf.mxu0
      %v415 = vpop.f32.mrf.mxu0
      %v416 = vpop.f32.mrf.mxu0
      %417 = vdwg.mxu0
      %v418 = vadd.f32 %v254, %v413
      %419 = vrot.lane.b32.xlu0 %v257, 120
      %v420 = vpop.permute.xlu0 %419
      %421 = vrot.lane.b32.xlu0 %v257, 88
      %v422 = vpop.permute.xlu0 %421
      %v424 = vsel %vm260, %v420, 0
      %v427 = vsel %vm260, %v422, 0
      %429 = vmatprep.subr.bf16.mxu0 0
      %430 = vmatpush1.bf16.xpose.msra.mxu0 0
      %431 = vmatprep.subr.bf16.mxu0 0
      %432 = vmatpush1.bf16.xpose.msra.mxu0 0
      %433 = vmatprep.subr.bf16.mxu0 0
      %434 = vmatpush1.bf16.xpose.msra.mxu0 0
      %435 = vmatprep.subr.bf16.mxu0 0
      %436 = vmatpush1.bf16.xpose.msra.mxu0 0
      %437 = vmatprep.subr.bf16.mxu0 0
      %438 = vmatpush1.bf16.xpose.msra.mxu0 0
      %439 = vmatprep.subr.bf16.mxu0 0
      %440 = vmatpush1.bf16.xpose.msra.mxu0 0
      %441 = vmatprep.subr.bf16.mxu0 0
      %442 = vmatpush1.bf16.xpose.msra.mxu0 0
      %443 = vmatprep.subr.bf16.mxu0 0
      %444 = vmatpush1.bf16.xpose.msra.mxu0 %v427
      %445 = vmatprep.subr.bf16.mxu0 0
      %446 = vmatpush2.bf16.xpose.msra.mxu0 0
      %447 = vmatprep.subr.bf16.mxu0 0
      %448 = vmatpush2.bf16.xpose.msra.mxu0 0
      %449 = vmatprep.subr.bf16.mxu0 0
      %450 = vmatpush2.bf16.xpose.msra.mxu0 0
      %451 = vmatprep.subr.bf16.mxu0 0
      %452 = vmatpush2.bf16.xpose.msra.mxu0 0
      %453 = vmatprep.subr.bf16.mxu0 0
      %454 = vmatpush2.bf16.xpose.msra.mxu0 0
      %455 = vmatprep.subr.bf16.mxu0 0
      %456 = vmatpush2.bf16.xpose.msra.mxu0 0
      %457 = vmatprep.subr.bf16.mxu0 0
      %458 = vmatpush2.bf16.xpose.msra.mxu0 0
      %459 = vmatprep.subr.bf16.mxu0 0
      %460 = vmatpush2.bf16.xpose.msra.mxu0 0
      %461 = vmatprep.mubr.bf16.mxu0 0
      %462 = vmatmul.mubr.bf16.gmra.mxu0 %v424
      %v463 = vpop.f32.mrf.mxu0
      %v464 = vadd.f32 0.0, %v463
      %v465 = vpop.f32.mrf.mxu0
      %v466 = vpop.f32.mrf.mxu0
      %v467 = vpop.f32.mrf.mxu0
      %468 = vdwg.mxu0
      %v469 = vmul.f32 %v464, 0.35355338
      %v470 = vsel %vm245, %v469, -1e+30
      %v471 = vsel %vm260, %v470, -inf
      %472 = vmax.xlane.f32.xlu0 %v471
      %v473 = vpop.xlane.xlu0 %472
      %v474 = vsub.f32 %v470, %v473
      %v475 = vmul.f32 %v474, 1.442695
      %v476 = vpow.pop %v475
      %v477 = vsel %vm260, %v476, 0.0
      %478 = vadd.xlane.f32.xlu0 %v477
      %v479 = vpop.xlane.xlu0 %478
      %v480 = vrcp.pop %v479
      %v481 = vmul.f32 %v476, %v480
      %v482 = vpack.c.bf16 %v481, %v481
      %483 = vrot.lane.b32.xlu0 %v257, 56
      %v484 = vpop.permute.xlu0 %483
      %v486 = vsel %vm260, %v482, 0
      %v489 = vsel %vm326, %v484, 0
      %491 = vmatprep.subr.bf16.mxu0 0
      %492 = vmatpush1.bf16.msra.mxu0 0
      %493 = vmatprep.subr.bf16.mxu0 0
      %494 = vmatpush1.bf16.msra.mxu0 0
      %495 = vmatprep.subr.bf16.mxu0 0
      %496 = vmatpush1.bf16.msra.mxu0 0
      %497 = vmatprep.subr.bf16.mxu0 0
      %498 = vmatpush1.bf16.msra.mxu0 0
      %499 = vmatprep.subr.bf16.mxu0 0
      %500 = vmatpush1.bf16.msra.mxu0 0
      %501 = vmatprep.subr.bf16.mxu0 0
      %502 = vmatpush1.bf16.msra.mxu0 0
      %503 = vmatprep.subr.bf16.mxu0 0
      %504 = vmatpush1.bf16.msra.mxu0 0
      %505 = vmatprep.subr.bf16.mxu0 0
      %506 = vmatpush1.bf16.msra.mxu0 %v489
      %507 = vmatprep.subr.bf16.mxu0 0
      %508 = vmatpush2.bf16.msra.mxu0 0
      %509 = vmatprep.subr.bf16.mxu0 0
      %510 = vmatpush2.bf16.msra.mxu0 0
      %511 = vmatprep.subr.bf16.mxu0 0
      %512 = vmatpush2.bf16.msra.mxu0 0
      %513 = vmatprep.subr.bf16.mxu0 0
      %514 = vmatpush2.bf16.msra.mxu0 0
      %515 = vmatprep.subr.bf16.mxu0 0
      %516 = vmatpush2.bf16.msra.mxu0 0
      %517 = vmatprep.subr.bf16.mxu0 0
      %518 = vmatpush2.bf16.msra.mxu0 0
      %519 = vmatprep.subr.bf16.mxu0 0
      %520 = vmatpush2.bf16.msra.mxu0 0
      %521 = vmatprep.subr.bf16.mxu0 0
      %522 = vmatpush2.bf16.msra.mxu0 0
      %523 = vmatprep.mubr.bf16.mxu0 0
      %524 = vmatmul.mubr.bf16.gmra.mxu0 %v486
      %v525 = vpop.f32.mrf.mxu0
      %v526 = vadd.f32 0.0, %v525
      %v527 = vpop.f32.mrf.mxu0
      %v528 = vpop.f32.mrf.mxu0
      %v529 = vpop.f32.mrf.mxu0
      %530 = vdwg.mxu0
      %v531 = vld [vmem:[%s1 + $0x4] sm:$0xf]
      %v532 = vpack.c.bf16 %v526, %v526
      %v534 = vsel %vm260, %v532, 0
      %v537 = vsel %vm326, %v531, 0
      %539 = vmatprep.subr.bf16.mxu0 0
      %540 = vmatpush1.bf16.msra.mxu0 0
      %541 = vmatprep.subr.bf16.mxu0 0
      %542 = vmatpush1.bf16.msra.mxu0 0
      %543 = vmatprep.subr.bf16.mxu0 0
      %544 = vmatpush1.bf16.msra.mxu0 0
      %545 = vmatprep.subr.bf16.mxu0 0
      %546 = vmatpush1.bf16.msra.mxu0 0
      %547 = vmatprep.subr.bf16.mxu0 0
      %548 = vmatpush1.bf16.msra.mxu0 0
      %549 = vmatprep.subr.bf16.mxu0 0
      %550 = vmatpush1.bf16.msra.mxu0 0
      %551 = vmatprep.subr.bf16.mxu0 0
      %552 = vmatpush1.bf16.msra.mxu0 0
      %553 = vmatprep.subr.bf16.mxu0 0
      %554 = vmatpush1.bf16.msra.mxu0 %v537
      %555 = vmatprep.subr.bf16.mxu0 0
      %556 = vmatpush2.bf16.msra.mxu0 0
      %557 = vmatprep.subr.bf16.mxu0 0
      %558 = vmatpush2.bf16.msra.mxu0 0
      %559 = vmatprep.subr.bf16.mxu0 0
      %560 = vmatpush2.bf16.msra.mxu0 0
      %561 = vmatprep.subr.bf16.mxu0 0
      %562 = vmatpush2.bf16.msra.mxu0 0
      %563 = vmatprep.subr.bf16.mxu0 0
      %564 = vmatpush2.bf16.msra.mxu0 0
      %565 = vmatprep.subr.bf16.mxu0 0
      %566 = vmatpush2.bf16.msra.mxu0 0
      %567 = vmatprep.subr.bf16.mxu0 0
      %568 = vmatpush2.bf16.msra.mxu0 0
      %569 = vmatprep.subr.bf16.mxu0 0
      %570 = vmatpush2.bf16.msra.mxu0 0
      %571 = vmatprep.mubr.bf16.mxu0 0
      %572 = vmatmul.mubr.bf16.gmra.mxu0 %v534
      %v573 = vpop.f32.mrf.mxu0
      %v574 = vadd.f32 0.0, %v573
      %v575 = vpop.f32.mrf.mxu0
      %v576 = vpop.f32.mrf.mxu0
      %v577 = vpop.f32.mrf.mxu0
      %578 = vdwg.mxu0
      %v579 = vadd.f32 %v418, %v574
      %580 = vrot.lane.b32.xlu0 %v257, 112
      %v581 = vpop.permute.xlu0 %580
      %582 = vrot.lane.b32.xlu0 %v257, 80
      %v583 = vpop.permute.xlu0 %582
      %v585 = vsel %vm260, %v581, 0
      %v588 = vsel %vm260, %v583, 0
      %590 = vmatprep.subr.bf16.mxu0 0
      %591 = vmatpush1.bf16.xpose.msra.mxu0 0
      %592 = vmatprep.subr.bf16.mxu0 0
      %593 = vmatpush1.bf16.xpose.msra.mxu0 0
      %594 = vmatprep.subr.bf16.mxu0 0
      %595 = vmatpush1.bf16.xpose.msra.mxu0 0
      %596 = vmatprep.subr.bf16.mxu0 0
      %597 = vmatpush1.bf16.xpose.msra.mxu0 0
      %598 = vmatprep.subr.bf16.mxu0 0
      %599 = vmatpush1.bf16.xpose.msra.mxu0 0
      %600 = vmatprep.subr.bf16.mxu0 0
      %601 = vmatpush1.bf16.xpose.msra.mxu0 0
      %602 = vmatprep.subr.bf16.mxu0 0
      %603 = vmatpush1.bf16.xpose.msra.mxu0 0
      %604 = vmatprep.subr.bf16.mxu0 0
      %605 = vmatpush1.bf16.xpose.msra.mxu0 %v588
      %606 = vmatprep.subr.bf16.mxu0 0
      %607 = vmatpush2.bf16.xpose.msra.mxu0 0
      %608 = vmatprep.subr.bf16.mxu0 0
      %609 = vmatpush2.bf16.xpose.msra.mxu0 0
      %610 = vmatprep.subr.bf16.mxu0 0
      %611 = vmatpush2.bf16.xpose.msra.mxu0 0
      %612 = vmatprep.subr.bf16.mxu0 0
      %613 = vmatpush2.bf16.xpose.msra.mxu0 0
      %614 = vmatprep.subr.bf16.mxu0 0
      %615 = vmatpush2.bf16.xpose.msra.mxu0 0
      %616 = vmatprep.subr.bf16.mxu0 0
      %617 = vmatpush2.bf16.xpose.msra.mxu0 0
      %618 = vmatprep.subr.bf16.mxu0 0
      %619 = vmatpush2.bf16.xpose.msra.mxu0 0
      %620 = vmatprep.subr.bf16.mxu0 0
      %621 = vmatpush2.bf16.xpose.msra.mxu0 0
      %622 = vmatprep.mubr.bf16.mxu0 0
      %623 = vmatmul.mubr.bf16.gmra.mxu0 %v585
      %v624 = vpop.f32.mrf.mxu0
      %v625 = vadd.f32 0.0, %v624
      %v626 = vpop.f32.mrf.mxu0
      %v627 = vpop.f32.mrf.mxu0
      %v628 = vpop.f32.mrf.mxu0
      %629 = vdwg.mxu0
      %v630 = vmul.f32 %v625, 0.35355338
      %v631 = vsel %vm245, %v630, -1e+30
      %v632 = vsel %vm260, %v631, -inf
      %633 = vmax.xlane.f32.xlu0 %v632
      %v634 = vpop.xlane.xlu0 %633
      %v635 = vsub.f32 %v631, %v634
      %v636 = vmul.f32 %v635, 1.442695
      %v637 = vpow.pop %v636
      %v638 = vsel %vm260, %v637, 0.0
      %639 = vadd.xlane.f32.xlu0 %v638
      %v640 = vpop.xlane.xlu0 %639
      %v641 = vrcp.pop %v640
      %v642 = vmul.f32 %v637, %v641
      %v643 = vpack.c.bf16 %v642, %v642
      %644 = vrot.lane.b32.xlu0 %v257, 48
      %v645 = vpop.permute.xlu0 %644
      %v647 = vsel %vm260, %v643, 0
      %v650 = vsel %vm326, %v645, 0
      %652 = vmatprep.subr.bf16.mxu0 0
      %653 = vmatpush1.bf16.msra.mxu0 0
      %654 = vmatprep.subr.bf16.mxu0 0
      %655 = vmatpush1.bf16.msra.mxu0 0
      %656 = vmatprep.subr.bf16.mxu0 0
      %657 = vmatpush1.bf16.msra.mxu0 0
      %658 = vmatprep.subr.bf16.mxu0 0
      %659 = vmatpush1.bf16.msra.mxu0 0
      %660 = vmatprep.subr.bf16.mxu0 0
      %661 = vmatpush1.bf16.msra.mxu0 0
      %662 = vmatprep.subr.bf16.mxu0 0
      %663 = vmatpush1.bf16.msra.mxu0 0
      %664 = vmatprep.subr.bf16.mxu0 0
      %665 = vmatpush1.bf16.msra.mxu0 0
      %666 = vmatprep.subr.bf16.mxu0 0
      %667 = vmatpush1.bf16.msra.mxu0 %v650
      %668 = vmatprep.subr.bf16.mxu0 0
      %669 = vmatpush2.bf16.msra.mxu0 0
      %670 = vmatprep.subr.bf16.mxu0 0
      %671 = vmatpush2.bf16.msra.mxu0 0
      %672 = vmatprep.subr.bf16.mxu0 0
      %673 = vmatpush2.bf16.msra.mxu0 0
      %674 = vmatprep.subr.bf16.mxu0 0
      %675 = vmatpush2.bf16.msra.mxu0 0
      %676 = vmatprep.subr.bf16.mxu0 0
      %677 = vmatpush2.bf16.msra.mxu0 0
      %678 = vmatprep.subr.bf16.mxu0 0
      %679 = vmatpush2.bf16.msra.mxu0 0
      %680 = vmatprep.subr.bf16.mxu0 0
      %681 = vmatpush2.bf16.msra.mxu0 0
      %682 = vmatprep.subr.bf16.mxu0 0
      %683 = vmatpush2.bf16.msra.mxu0 0
      %684 = vmatprep.mubr.bf16.mxu0 0
      %685 = vmatmul.mubr.bf16.gmra.mxu0 %v647
      %v686 = vpop.f32.mrf.mxu0
      %v687 = vadd.f32 0.0, %v686
      %v688 = vpop.f32.mrf.mxu0
      %v689 = vpop.f32.mrf.mxu0
      %v690 = vpop.f32.mrf.mxu0
      %691 = vdwg.mxu0
      %v692 = vld [vmem:[%s1 + $0x8] sm:$0xf]
      %v693 = vpack.c.bf16 %v687, %v687
      %v695 = vsel %vm260, %v693, 0
      %v698 = vsel %vm326, %v692, 0
      %700 = vmatprep.subr.bf16.mxu0 0
      %701 = vmatpush1.bf16.msra.mxu0 0
      %702 = vmatprep.subr.bf16.mxu0 0
      %703 = vmatpush1.bf16.msra.mxu0 0
      %704 = vmatprep.subr.bf16.mxu0 0
      %705 = vmatpush1.bf16.msra.mxu0 0
      %706 = vmatprep.subr.bf16.mxu0 0
      %707 = vmatpush1.bf16.msra.mxu0 0
      %708 = vmatprep.subr.bf16.mxu0 0
      %709 = vmatpush1.bf16.msra.mxu0 0
      %710 = vmatprep.subr.bf16.mxu0 0
      %711 = vmatpush1.bf16.msra.mxu0 0
      %712 = vmatprep.subr.bf16.mxu0 0
      %713 = vmatpush1.bf16.msra.mxu0 0
      %714 = vmatprep.subr.bf16.mxu0 0
      %715 = vmatpush1.bf16.msra.mxu0 %v698
      %716 = vmatprep.subr.bf16.mxu0 0
      %717 = vmatpush2.bf16.msra.mxu0 0
      %718 = vmatprep.subr.bf16.mxu0 0
      %719 = vmatpush2.bf16.msra.mxu0 0
      %720 = vmatprep.subr.bf16.mxu0 0
      %721 = vmatpush2.bf16.msra.mxu0 0
      %722 = vmatprep.subr.bf16.mxu0 0
      %723 = vmatpush2.bf16.msra.mxu0 0
      %724 = vmatprep.subr.bf16.mxu0 0
      %725 = vmatpush2.bf16.msra.mxu0 0
      %726 = vmatprep.subr.bf16.mxu0 0
      %727 = vmatpush2.bf16.msra.mxu0 0
      %728 = vmatprep.subr.bf16.mxu0 0
      %729 = vmatpush2.bf16.msra.mxu0 0
      %730 = vmatprep.subr.bf16.mxu0 0
      %731 = vmatpush2.bf16.msra.mxu0 0
      %732 = vmatprep.mubr.bf16.mxu0 0
      %733 = vmatmul.mubr.bf16.gmra.mxu0 %v695
      %v734 = vpop.f32.mrf.mxu0
      %v735 = vadd.f32 0.0, %v734
      %v736 = vpop.f32.mrf.mxu0
      %v737 = vpop.f32.mrf.mxu0
      %v738 = vpop.f32.mrf.mxu0
      %739 = vdwg.mxu0
      %v740 = vadd.f32 %v579, %v735
      %741 = vrot.lane.b32.xlu0 %v257, 104
      %v742 = vpop.permute.xlu0 %741
      %743 = vrot.lane.b32.xlu0 %v257, 72
      %v744 = vpop.permute.xlu0 %743
      %v746 = vsel %vm260, %v742, 0
      %v749 = vsel %vm260, %v744, 0
      %751 = vmatprep.subr.bf16.mxu0 0
      %752 = vmatpush1.bf16.xpose.msra.mxu0 0
      %753 = vmatprep.subr.bf16.mxu0 0
      %754 = vmatpush1.bf16.xpose.msra.mxu0 0
      %755 = vmatprep.subr.bf16.mxu0 0
      %756 = vmatpush1.bf16.xpose.msra.mxu0 0
      %757 = vmatprep.subr.bf16.mxu0 0
      %758 = vmatpush1.bf16.xpose.msra.mxu0 0
      %759 = vmatprep.subr.bf16.mxu0 0
      %760 = vmatpush1.bf16.xpose.msra.mxu0 0
      %761 = vmatprep.subr.bf16.mxu0 0
      %762 = vmatpush1.bf16.xpose.msra.mxu0 0
      %763 = vmatprep.subr.bf16.mxu0 0
      %764 = vmatpush1.bf16.xpose.msra.mxu0 0
      %765 = vmatprep.subr.bf16.mxu0 0
      %766 = vmatpush1.bf16.xpose.msra.mxu0 %v749
      %767 = vmatprep.subr.bf16.mxu0 0
      %768 = vmatpush2.bf16.xpose.msra.mxu0 0
      %769 = vmatprep.subr.bf16.mxu0 0
      %770 = vmatpush2.bf16.xpose.msra.mxu0 0
      %771 = vmatprep.subr.bf16.mxu0 0
      %772 = vmatpush2.bf16.xpose.msra.mxu0 0
      %773 = vmatprep.subr.bf16.mxu0 0
      %774 = vmatpush2.bf16.xpose.msra.mxu0 0
      %775 = vmatprep.subr.bf16.mxu0 0
      %776 = vmatpush2.bf16.xpose.msra.mxu0 0
      %777 = vmatprep.subr.bf16.mxu0 0
      %778 = vmatpush2.bf16.xpose.msra.mxu0 0
      %779 = vmatprep.subr.bf16.mxu0 0
      %780 = vmatpush2.bf16.xpose.msra.mxu0 0
      %781 = vmatprep.subr.bf16.mxu0 0
      %782 = vmatpush2.bf16.xpose.msra.mxu0 0
      %783 = vmatprep.mubr.bf16.mxu0 0
      %784 = vmatmul.mubr.bf16.gmra.mxu0 %v746
      %v785 = vpop.f32.mrf.mxu0
      %v786 = vadd.f32 0.0, %v785
      %v787 = vpop.f32.mrf.mxu0
      %v788 = vpop.f32.mrf.mxu0
      %v789 = vpop.f32.mrf.mxu0
      %790 = vdwg.mxu0
      %v791 = vmul.f32 %v786, 0.35355338
      %v792 = vsel %vm245, %v791, -1e+30
      %v793 = vsel %vm260, %v792, -inf
      %794 = vmax.xlane.f32.xlu0 %v793
      %v795 = vpop.xlane.xlu0 %794
      %v796 = vsub.f32 %v792, %v795
      %v797 = vmul.f32 %v796, 1.442695
      %v798 = vpow.pop %v797
      %v799 = vsel %vm260, %v798, 0.0
      %800 = vadd.xlane.f32.xlu0 %v799
      %v801 = vpop.xlane.xlu0 %800
      %v802 = vrcp.pop %v801
      %v803 = vmul.f32 %v798, %v802
      %v804 = vpack.c.bf16 %v803, %v803
      %805 = vrot.lane.b32.xlu0 %v257, 40
      %v806 = vpop.permute.xlu0 %805
      %v808 = vsel %vm260, %v804, 0
      %v811 = vsel %vm326, %v806, 0
      %813 = vmatprep.subr.bf16.mxu0 0
      %814 = vmatpush1.bf16.msra.mxu0 0
      %815 = vmatprep.subr.bf16.mxu0 0
      %816 = vmatpush1.bf16.msra.mxu0 0
      %817 = vmatprep.subr.bf16.mxu0 0
      %818 = vmatpush1.bf16.msra.mxu0 0
      %819 = vmatprep.subr.bf16.mxu0 0
      %820 = vmatpush1.bf16.msra.mxu0 0
      %821 = vmatprep.subr.bf16.mxu0 0
      %822 = vmatpush1.bf16.msra.mxu0 0
      %823 = vmatprep.subr.bf16.mxu0 0
      %824 = vmatpush1.bf16.msra.mxu0 0
      %825 = vmatprep.subr.bf16.mxu0 0
      %826 = vmatpush1.bf16.msra.mxu0 0
      %827 = vmatprep.subr.bf16.mxu0 0
      %828 = vmatpush1.bf16.msra.mxu0 %v811
      %829 = vmatprep.subr.bf16.mxu0 0
      %830 = vmatpush2.bf16.msra.mxu0 0
      %831 = vmatprep.subr.bf16.mxu0 0
      %832 = vmatpush2.bf16.msra.mxu0 0
      %833 = vmatprep.subr.bf16.mxu0 0
      %834 = vmatpush2.bf16.msra.mxu0 0
      %835 = vmatprep.subr.bf16.mxu0 0
      %836 = vmatpush2.bf16.msra.mxu0 0
      %837 = vmatprep.subr.bf16.mxu0 0
      %838 = vmatpush2.bf16.msra.mxu0 0
      %839 = vmatprep.subr.bf16.mxu0 0
      %840 = vmatpush2.bf16.msra.mxu0 0
      %841 = vmatprep.subr.bf16.mxu0 0
      %842 = vmatpush2.bf16.msra.mxu0 0
      %843 = vmatprep.subr.bf16.mxu0 0
      %844 = vmatpush2.bf16.msra.mxu0 0
      %845 = vmatprep.mubr.bf16.mxu0 0
      %846 = vmatmul.mubr.bf16.gmra.mxu0 %v808
      %v847 = vpop.f32.mrf.mxu0
      %v848 = vadd.f32 0.0, %v847
      %v849 = vpop.f32.mrf.mxu0
      %v850 = vpop.f32.mrf.mxu0
      %v851 = vpop.f32.mrf.mxu0
      %852 = vdwg.mxu0
      %v853 = vld [vmem:[%s1 + $0xc] sm:$0xf]
      %v854 = vpack.c.bf16 %v848, %v848
      %v856 = vsel %vm260, %v854, 0
      %v859 = vsel %vm326, %v853, 0
      %861 = vmatprep.subr.bf16.mxu0 0
      %862 = vmatpush1.bf16.msra.mxu0 0
      %863 = vmatprep.subr.bf16.mxu0 0
      %864 = vmatpush1.bf16.msra.mxu0 0
      %865 = vmatprep.subr.bf16.mxu0 0
      %866 = vmatpush1.bf16.msra.mxu0 0
      %867 = vmatprep.subr.bf16.mxu0 0
      %868 = vmatpush1.bf16.msra.mxu0 0
      %869 = vmatprep.subr.bf16.mxu0 0
      %870 = vmatpush1.bf16.msra.mxu0 0
      %871 = vmatprep.subr.bf16.mxu0 0
      %872 = vmatpush1.bf16.msra.mxu0 0
      %873 = vmatprep.subr.bf16.mxu0 0
      %874 = vmatpush1.bf16.msra.mxu0 0
      %875 = vmatprep.subr.bf16.mxu0 0
      %876 = vmatpush1.bf16.msra.mxu0 %v859
      %877 = vmatprep.subr.bf16.mxu0 0
      %878 = vmatpush2.bf16.msra.mxu0 0
      %879 = vmatprep.subr.bf16.mxu0 0
      %880 = vmatpush2.bf16.msra.mxu0 0
      %881 = vmatprep.subr.bf16.mxu0 0
      %882 = vmatpush2.bf16.msra.mxu0 0
      %883 = vmatprep.subr.bf16.mxu0 0
      %884 = vmatpush2.bf16.msra.mxu0 0
      %885 = vmatprep.subr.bf16.mxu0 0
      %886 = vmatpush2.bf16.msra.mxu0 0
      %887 = vmatprep.subr.bf16.mxu0 0
      %888 = vmatpush2.bf16.msra.mxu0 0
      %889 = vmatprep.subr.bf16.mxu0 0
      %890 = vmatpush2.bf16.msra.mxu0 0
      %891 = vmatprep.subr.bf16.mxu0 0
      %892 = vmatpush2.bf16.msra.mxu0 0
      %893 = vmatprep.mubr.bf16.mxu0 0
      %894 = vmatmul.mubr.bf16.gmra.mxu0 %v856
      %v895 = vpop.f32.mrf.mxu0
      %v896 = vadd.f32 0.0, %v895
      %v897 = vpop.f32.mrf.mxu0
      %v898 = vpop.f32.mrf.mxu0
      %v899 = vpop.f32.mrf.mxu0
      %900 = vdwg.mxu0
      %v901 = vadd.f32 %v740, %v896
      %vm902 = vcmask 261120
      %903 = vst.msk [vmem:[%s240] sm:$0xff] %vm902, %v901
      %p904 = scmp.lt.s32.totalorder %s19, 1
      %s905 = scalar_select %p904, %s19, 1
      %p906 = scmp.lt.s32.totalorder %s20, 0
      %s907 = scalar_select %p906, %s20, 0
      %s908 = sadd.s32 %s907, %s905
      %s909 = smul.addr %s908, 8
      %s910 = scalar_lea.vmem %s4, %s909
      // Predicated region
      $region37: #{vit_forward.11} parent=35 // pred_check
        %p911 = pneg %p143
      $region38: #{vit_forward.11} parent=35 // pred_check_branch
        %913 = sbr.rel (%p911) target = $region40
      $region39: #{vit_forward.11} parent=35 // pred_region
        _
      $region40: #{vit_forward.11} parent=35 // pred_fallthru
        _
    $region36: #{vit_forward.11} parent=5 // pred_fallthru
      _
    %p914 = scmp.le.s32.totalorder 2, %s10
    // Predicated region
    $region41: #{vit_forward.11} parent=5 // pred_check
      %p915 = pneg %p914
    $region42: #{vit_forward.11} parent=5 // pred_check_branch
      %917 = sbr.rel (%p915) target = $region44
    $region43: #{vit_forward.11} parent=5 // pred_region
      %s918 = ssub.s32 %s10, 2
      // Predicated region
      $region45: #{vit_forward.11} parent=43 // pred_check
        %p919 = pneg %p149
      $region46: #{vit_forward.11} parent=43 // pred_check_branch
        %921 = sbr.rel (%p919) target = $region48
      $region47: #{vit_forward.11} parent=43 // pred_region
        %p922 = scmp.lt.s32.totalorder %s21, 1
        %s923 = scalar_select %p922, %s21, 1
        %p924 = scmp.lt.s32.totalorder %s22, 0
        %s925 = scalar_select %p924, %s22, 0
        %s926 = sadd.s32 %s925, %s923
        %s927 = smul.addr %s926, 8
        %s928 = scalar_lea.vmem %s4, %s927
      $region48: #{vit_forward.11} parent=43 // pred_fallthru
        _
    $region44: #{vit_forward.11} parent=5 // pred_fallthru
      _
  $region6: #{vit_forward.11} parent=0 // loop_footer
    %s14 = sadd.s32 1, %s10
  $region7: #{vit_forward.11} parent=0 // loop_footer_branch
    %9 = sbr.rel target = $region3
  $region8: #{vit_forward.11} parent=0 // loop_exit
    _

// kernel: vit_forward.12
$region0: #{vit_forward.12}
  #allocation0 [shape = 'u32[]', space=smem, size = 0x4, offset = 0x4, fixed_abs, tag = 'smem constant byte address 0x4 - core index']
  #allocation1 [shape = 'u32[144,128]{1,0:T(1,128)}', space=vmem, size = 0x12000, scoped, tag = 'internal scratch']
  #allocation2 [shape = 'f32[16,64]{1,0:T(8,128)}', space=vmem, size = 0x2000, scoped, tag = 'scratch operand']
  #allocation3 [shape = 'bf16[16,32]{1,0:T(8,128)(2,1)}', space=vmem, size = 0x1000, scoped, tag = 'scratch operand']
  %s0 = inlined_call_operand.vmem [shape: f32[16,32], index: 0, kind: input, shape index: {}]
  %s1 = inlined_call_operand.vmem [shape: bf16[32,64], index: 1, kind: input, shape index: {}]
  %s2 = inlined_call_operand.vmem [shape: f32[1,32], index: 2, kind: input, shape index: {}]
  %s3 = inlined_call_operand.vmem [shape: f32[1,32], index: 3, kind: input, shape index: {}]
  %s4 = inlined_call_operand.vmem [shape: f32[1,64], index: 4, kind: input, shape index: {}]
  %s5 = inlined_call_operand.vmem [shape: bf16[16,64], index: 5, kind: output, shape index: {}]
  %s6 = sld [smem:[#allocation0]]
  $region42: #{vit_forward.12} parent=0
    _
  %s8 = ssub.s32 1, %s6
  %s9 = scalar_select 0, %s8, %s6
  // Predicated region
  $region2: #{vit_forward.12} parent=0 // pred_check
    _
  $region3: #{vit_forward.12} parent=0 // pred_check_branch
    %11 = sbr.rel (0) target = $region5
  $region4: #{vit_forward.12} parent=0 // pred_region
    _
  $region5: #{vit_forward.12} parent=0 // pred_fallthru
    _
  // Predicated region
  $region6: #{vit_forward.12} parent=0 // pred_check
    _
  $region7: #{vit_forward.12} parent=0 // pred_check_branch
    %13 = sbr.rel (0) target = $region9
  $region8: #{vit_forward.12} parent=0 // pred_region
    _
  $region9: #{vit_forward.12} parent=0 // pred_fallthru
    _
  // Predicated region
  $region10: #{vit_forward.12} parent=0 // pred_check
    _
  $region11: #{vit_forward.12} parent=0 // pred_check_branch
    %15 = sbr.rel (0) target = $region13
  $region12: #{vit_forward.12} parent=0 // pred_region
    _
  $region13: #{vit_forward.12} parent=0 // pred_fallthru
    _
  // Predicated region
  $region14: #{vit_forward.12} parent=0 // pred_check
    _
  $region15: #{vit_forward.12} parent=0 // pred_check_branch
    %17 = sbr.rel (0) target = $region17
  $region16: #{vit_forward.12} parent=0 // pred_region
    _
  $region17: #{vit_forward.12} parent=0 // pred_fallthru
    _
  // Predicated region
  $region18: #{vit_forward.12} parent=0 // pred_check
    _
  $region19: #{vit_forward.12} parent=0 // pred_check_branch
    %19 = sbr.rel (0) target = $region21
  $region20: #{vit_forward.12} parent=0 // pred_region
    _
  $region21: #{vit_forward.12} parent=0 // pred_fallthru
    _
  %p21 = scmp.eq.s32.totalorder 0, 0
  // Predicated region
  $region22: #{vit_forward.12} parent=0 // pred_check
    %p22 = pneg %p21
  $region23: #{vit_forward.12} parent=0 // pred_check_branch
    %24 = sbr.rel (%p22) target = $region25
  $region24: #{vit_forward.12} parent=0 // pred_region
    %vm25 = vcmask 523264
    %26 = vst.msk [vmem:[#allocation2] sm:$0xff] %vm25, 0.0
    %27 = vst.msk [vmem:[#allocation2 + $0x8] sm:$0xff] %vm25, 0.0
  $region25: #{vit_forward.12} parent=0 // pred_fallthru
    _
  %p28 = scmp.eq.s32.totalorder 0, 0
  // Predicated region
  $region26: #{vit_forward.12} parent=0 // pred_check
    %p29 = pneg %p28
  $region27: #{vit_forward.12} parent=0 // pred_check_branch
    %31 = sbr.rel (%p29) target = $region29
  $region28: #{vit_forward.12} parent=0 // pred_region
    %v32 = vld [vmem:[%s0] sm:$0xff]
    %v33 = vld [vmem:[%s0 + $0x8] sm:$0xff]
    %vm34 = vcmask 261120
    %v35 = vsel %vm34, %v32, 0.0
    %36 = vadd.xlane.f32.xlu0 %v35
    %v37 = vpop.xlane.xlu0 %36
    %v38 = vsel %vm34, %v33, 0.0
    %39 = vadd.xlane.f32.xlu0 %v38
    %v40 = vpop.xlane.xlu0 %39
    %v41 = vrcp.pop 32.0
    %v42 = vmul.f32 %v37, %v41
    %v43 = vmul.f32 %v40, %v41
    %v44 = vsub.f32 %v32, %v42
    %v45 = vsub.f32 %v33, %v43
    %v46 = vmul.f32 %v44, %v44
    %v47 = vmul.f32 %v45, %v45
    %v48 = vsel %vm34, %v46, 0.0
    %49 = vadd.xlane.f32.xlu0 %v48
    %v50 = vpop.xlane.xlu0 %49
    %v51 = vsel %vm34, %v47, 0.0
    %52 = vadd.xlane.f32.xlu0 %v51
    %v53 = vpop.xlane.xlu0 %52
    %v54 = vmul.f32 %v50, %v41
    %v55 = vmul.f32 %v53, %v41
    %v56 = vadd.f32 %v54, 1e-05
    %v57 = vadd.f32 %v55, 1e-05
    %v58 = vrsqrt.pop %v56
    %v59 = vrsqrt.pop %v57
    %v60 = vmul.f32 %v44, %v58
    %v61 = vmul.f32 %v45, %v59
    %v62 = vld [vmem:[%s2] sm:$0x1]
    %v64 = vlaneseq
    %v65 = vshrl.u32 %v64, 7
    %v66 = vsub.s32 0, %v65
    %v67 = vrot.slane %v62, %v66
    %v69 = vmul.f32 %v60, %v67
    %v70 = vmul.f32 %v61, %v67
    %v71 = vld [vmem:[%s3] sm:$0x1]
    %v73 = vlaneseq
    %v74 = vshrl.u32 %v73, 7
    %v75 = vsub.s32 0, %v74
    %v76 = vrot.slane %v71, %v75
    %v78 = vadd.f32 %v69, %v76
    %v79 = vadd.f32 %v70, %v76
    %v80 = vpack.c.bf16 %v79, %v78
    %v82 = vunpack.c.l.b16 %v80
    %v83 = vunpack.c.h.b16 %v80
    %v84 = vpack.c.b16 %v82, %v82
    %v85 = vpack.c.b16 %v83, %v83
    %vm88 = vcmask 257024
    %89 = vst.msk [vmem:[#allocation3] sm:$0xf] %vm88, %v84
    %90 = vst.msk [vmem:[#allocation3 + $0x4] sm:$0xf] %vm88, %v85
  $region29: #{vit_forward.12} parent=0 // pred_fallthru
    _
  %v91 = vld [vmem:[#allocation3] sm:$0xf]
  %v92 = vld [vmem:[#allocation3 + $0x4] sm:$0xf]
  %v93 = vld [vmem:[%s1] sm:$0xf]
  %v94 = vld [vmem:[%s1 + $0x4] sm:$0xf]
  %v95 = vld [vmem:[%s1 + $0x8] sm:$0xf]
  %v96 = vld [vmem:[%s1 + $0xc] sm:$0xf]
  %v97 = vld [vmem:[#allocation2] sm:$0xff]
  %v98 = vld [vmem:[#allocation2 + $0x8] sm:$0xff]
  %v101 = vunpack.c.l.b16 %v91
  %v102 = vunpack.c.l.b16 %v92
  %v103 = vpack.c.b16 %v102, %v101
  %v108 = vunpack.c.l.b16 %v93
  %v109 = vunpack.c.l.b16 %v94
  %v110 = vunpack.c.l.b16 %v95
  %v111 = vunpack.c.l.b16 %v96
  %v112 = vpack.c.b16 %v109, %v108
  %v113 = vpack.c.b16 %v111, %v110
  %vm116 = vcmask 261120
  %v118 = vsel %vm116, %v103, 0
  %120 = vmatprep.subr.bf16.mxu0 0
  %121 = vmatpush1.bf16.msra.mxu0 0
  %122 = vmatprep.subr.bf16.mxu0 0
  %123 = vmatpush1.bf16.msra.mxu0 0
  %124 = vmatprep.subr.bf16.mxu0 0
  %125 = vmatpush1.bf16.msra.mxu0 0
  %126 = vmatprep.subr.bf16.mxu0 0
  %127 = vmatpush1.bf16.msra.mxu0 0
  %128 = vmatprep.subr.bf16.mxu0 0
  %129 = vmatpush1.bf16.msra.mxu0 0
  %130 = vmatprep.subr.bf16.mxu0 0
  %131 = vmatpush1.bf16.msra.mxu0 0
  %132 = vmatprep.subr.bf16.mxu0 0
  %133 = vmatpush1.bf16.msra.mxu0 %v113
  %134 = vmatprep.subr.bf16.mxu0 0
  %135 = vmatpush1.bf16.msra.mxu0 %v112
  %136 = vmatprep.subr.bf16.mxu0 0
  %137 = vmatpush2.bf16.msra.mxu0 0
  %138 = vmatprep.subr.bf16.mxu0 0
  %139 = vmatpush2.bf16.msra.mxu0 0
  %140 = vmatprep.subr.bf16.mxu0 0
  %141 = vmatpush2.bf16.msra.mxu0 0
  %142 = vmatprep.subr.bf16.mxu0 0
  %143 = vmatpush2.bf16.msra.mxu0 0
  %144 = vmatprep.subr.bf16.mxu0 0
  %145 = vmatpush2.bf16.msra.mxu0 0
  %146 = vmatprep.subr.bf16.mxu0 0
  %147 = vmatpush2.bf16.msra.mxu0 0
  %148 = vmatprep.subr.bf16.mxu0 0
  %149 = vmatpush2.bf16.msra.mxu0 0
  %150 = vmatprep.subr.bf16.mxu0 0
  %151 = vmatpush2.bf16.msra.mxu0 0
  %152 = vmatprep.mubr.bf16.mxu0 0
  %153 = vmatmul.mubr.bf16.gmra.mxu0 %v118
  %v154 = vpop.f32.mrf.mxu0
  %v155 = vadd.f32 0.0, %v154
  %v156 = vpop.f32.mrf.mxu0
  %v157 = vpop.f32.mrf.mxu0
  %v158 = vadd.f32 0.0, %v157
  %v159 = vpop.f32.mrf.mxu0
  %160 = vdwg.mxu0
  %v161 = vadd.f32 %v97, %v155
  %v162 = vadd.f32 %v98, %v158
  %vm163 = vcmask 523264
  %164 = vst.msk [vmem:[#allocation2] sm:$0xff] %vm163, %v161
  %165 = vst.msk [vmem:[#allocation2 + $0x8] sm:$0xff] %vm163, %v162
  // Predicated region
  $region30: #{vit_forward.12} parent=0 // pred_check
    %p166 = pneg %p21
  $region31: #{vit_forward.12} parent=0 // pred_check_branch
    %168 = sbr.rel (%p166) target = $region33
  $region32: #{vit_forward.12} parent=0 // pred_region
    %v169 = vld [vmem:[#allocation2] sm:$0xff]
    %v170 = vld [vmem:[#allocation2 + $0x8] sm:$0xff]
    %v171 = vld [vmem:[%s4] sm:$0x1]
    %v173 = vlaneseq
    %v174 = vshrl.u32 %v173, 7
    %v175 = vsub.s32 0, %v174
    %v176 = vrot.slane %v171, %v175
    %v178 = vadd.f32 %v169, %v176
    %v179 = vadd.f32 %v170, %v176
    %v180 = vmul.f32 %v178, 0.5
    %v181 = vmul.f32 %v179, 0.5
    %v182 = vmul.f32 %v178, 0.70710677
    %v183 = vmul.f32 %v179, 0.70710677
    %v184 = vmax.f32 %v182, -3.832507
    %v185 = vmax.f32 %v183, -3.832507
    %v186 = vmin.f32 %v184, 3.832507
    %v187 = vmin.f32 %v185, 3.832507
    %v188 = vmul.f32 %v186, %v186
    %v189 = vmul.f32 %v187, %v187
    %v190 = vmul.f32 %v188, -2.7261424e-10
    %v191 = vmul.f32 %v189, -2.7261424e-10
    %v192 = vadd.f32 %v190, 2.7706815e-08
    %v193 = vadd.f32 %v191, 2.7706815e-08
    %v194 = vmul.f32 %v192, %v188
    %v195 = vmul.f32 %v193, %v189
    %v196 = vadd.f32 %v194, -2.101024e-06
    %v197 = vadd.f32 %v195, -2.101024e-06
    %v198 = vmul.f32 %v196, %v188
    %v199 = vmul.f32 %v197, %v189
    %v200 = vadd.f32 %v198, -5.6925062e-05
    %v201 = vadd.f32 %v199, -5.6925062e-05
    %v202 = vmul.f32 %v200, %v188
    %v203 = vmul.f32 %v201, %v189
    %v204 = vadd.f32 %v202, -0.00073499064
    %v205 = vadd.f32 %v203, -0.00073499064
    %v206 = vmul.f32 %v204, %v188
    %v207 = vmul.f32 %v205, %v189
    %v208 = vadd.f32 %v206, -0.0029546
    %v209 = vadd.f32 %v207, -0.0029546
    %v210 = vmul.f32 %v208, %v188
    %v211 = vmul.f32 %v209, %v189
    %v212 = vadd.f32 %v210, -0.016096033
    %v213 = vadd.f32 %v211, -0.016096033
    %v214 = vmul.f32 %v212, %v186
    %v215 = vmul.f32 %v213, %v187
    %v216 = vmul.f32 %v188, -1.45660715e-05
    %v217 = vmul.f32 %v189, -1.45660715e-05
    %v218 = vadd.f32 %v216, -0.00021337405
    %v219 = vadd.f32 %v217, -0.00021337405
    %v220 = vmul.f32 %v218, %v188
    %v221 = vmul.f32 %v219, %v189
    %v222 = vadd.f32 %v220, -0.001682827
    %v223 = vadd.f32 %v221, -0.001682827
    %v224 = vmul.f32 %v222, %v188
    %v225 = vmul.f32 %v223, %v189
    %v226 = vadd.f32 %v224, -0.0073733293
    %v227 = vadd.f32 %v225, -0.0073733293
    %v228 = vmul.f32 %v226, %v188
    %v229 = vmul.f32 %v227, %v189
    %v230 = vadd.f32 %v228, -0.014264739
    %v231 = vadd.f32 %v229, -0.014264739
    %v232 = vrcp.pop %v230
    %v233 = vrcp.pop %v231
    %v234 = vmul.f32 %v214, %v232
    %v235 = vmul.f32 %v215, %v233
    %v236 = vadd.f32 %v234, 1.0
    %v237 = vadd.f32 %v235, 1.0
    %v238 = vmul.f32 %v180, %v236
    %v239 = vmul.f32 %v181, %v237
    %v240 = vpack.c.bf16 %v239, %v238
    %v242 = vunpack.c.l.b16 %v240
    %v243 = vunpack.c.h.b16 %v240
    %v244 = vpack.c.b16 %v242, %v242
    %v245 = vpack.c.b16 %v243, %v243
    %vm248 = vcmask 519168
    %249 = vst.msk [vmem:[%s5] sm:$0xf] %vm248, %v244
    %250 = vst.msk [vmem:[%s5 + $0x4] sm:$0xf] %vm248, %v245
  $region33: #{vit_forward.12} parent=0 // pred_fallthru
    _
  // Predicated region
  $region34: #{vit_forward.12} parent=0 // pred_check
    _
  $region35: #{vit_forward.12} parent=0 // pred_check_branch
    %252 = sbr.rel (0) target = $region37
  $region36: #{vit_forward.12} parent=0 // pred_region
    _
  $region37: #{vit_forward.12} parent=0 // pred_fallthru
    _
  // Predicated region
  $region38: #{vit_forward.12} parent=0 // pred_check
    _
  $region39: #{vit_forward.12} parent=0 // pred_check_branch
    %254 = sbr.rel (0) target = $region41
  $region40: #{vit_forward.12} parent=0 // pred_region
    _
  $region41: #{vit_forward.12} parent=0 // pred_fallthru
    _

// kernel: vit_forward.13
$region0: #{vit_forward.13}
  #allocation0 [shape = 'u32[]', space=smem, size = 0x4, offset = 0x4, fixed_abs, tag = 'smem constant byte address 0x4 - core index']
  #allocation1 [shape = 'u32[144,128]{1,0:T(1,128)}', space=vmem, size = 0x12000, scoped, tag = 'internal scratch']
  %s0 = inlined_call_operand.vmem [shape: bf16[16,64], index: 0, kind: input, shape index: {}]
  %s1 = inlined_call_operand.vmem [shape: bf16[64,32], index: 1, kind: input, shape index: {}]
  %s2 = inlined_call_operand.vmem [shape: f32[1,32], index: 2, kind: input, shape index: {}]
  %s3 = inlined_call_operand.vmem [shape: f32[16,32], index: 3, kind: input, shape index: {}]
  %s4 = inlined_call_operand.vmem [shape: f32[16,32], index: 4, kind: output, shape index: {}]
  %s5 = sld [smem:[#allocation0]]
  $region34: #{vit_forward.13} parent=0
    _
  %s7 = ssub.s32 1, %s5
  %s8 = scalar_select 0, %s7, %s5
  // Predicated region
  $region2: #{vit_forward.13} parent=0 // pred_check
    _
  $region3: #{vit_forward.13} parent=0 // pred_check_branch
    %10 = sbr.rel (0) target = $region5
  $region4: #{vit_forward.13} parent=0 // pred_region
    _
  $region5: #{vit_forward.13} parent=0 // pred_fallthru
    _
  // Predicated region
  $region6: #{vit_forward.13} parent=0 // pred_check
    _
  $region7: #{vit_forward.13} parent=0 // pred_check_branch
    %12 = sbr.rel (0) target = $region9
  $region8: #{vit_forward.13} parent=0 // pred_region
    _
  $region9: #{vit_forward.13} parent=0 // pred_fallthru
    _
  // Predicated region
  $region10: #{vit_forward.13} parent=0 // pred_check
    _
  $region11: #{vit_forward.13} parent=0 // pred_check_branch
    %14 = sbr.rel (0) target = $region13
  $region12: #{vit_forward.13} parent=0 // pred_region
    _
  $region13: #{vit_forward.13} parent=0 // pred_fallthru
    _
  // Predicated region
  $region14: #{vit_forward.13} parent=0 // pred_check
    _
  $region15: #{vit_forward.13} parent=0 // pred_check_branch
    %16 = sbr.rel (0) target = $region17
  $region16: #{vit_forward.13} parent=0 // pred_region
    _
  $region17: #{vit_forward.13} parent=0 // pred_fallthru
    _
  %p18 = scmp.eq.s32.totalorder 0, 0
  // Predicated region
  $region18: #{vit_forward.13} parent=0 // pred_check
    %p19 = pneg %p18
  $region19: #{vit_forward.13} parent=0 // pred_check_branch
    %21 = sbr.rel (%p19) target = $region21
  $region20: #{vit_forward.13} parent=0 // pred_region
    %vm22 = vcmask 261120
    %23 = vst.msk [vmem:[%s4] sm:$0xff] %vm22, 0.0
    %24 = vst.msk [vmem:[%s4 + $0x8] sm:$0xff] %vm22, 0.0
  $region21: #{vit_forward.13} parent=0 // pred_fallthru
    _
  %v25 = vld [vmem:[%s0] sm:$0xf]
  %v26 = vld [vmem:[%s0 + $0x4] sm:$0xf]
  %v27 = vld [vmem:[%s1] sm:$0xf]
  %v28 = vld [vmem:[%s1 + $0x4] sm:$0xf]
  %v29 = vld [vmem:[%s1 + $0x8] sm:$0xf]
  %v30 = vld [vmem:[%s1 + $0xc] sm:$0xf]
  %v31 = vld [vmem:[%s1 + $0x10] sm:$0xf]
  %v32 = vld [vmem:[%s1 + $0x14] sm:$0xf]
  %v33 = vld [vmem:[%s1 + $0x18] sm:$0xf]
  %v34 = vld [vmem:[%s1 + $0x1c] sm:$0xf]
  %v35 = vld [vmem:[%s4] sm:$0xff]
  %v36 = vld [vmem:[%s4 + $0x8] sm:$0xff]
  %v39 = vunpack.c.l.b16 %v25
  %v40 = vunpack.c.l.b16 %v26
  %v41 = vpack.c.b16 %v40, %v39
  %v50 = vunpack.c.l.b16 %v27
  %v51 = vunpack.c.l.b16 %v28
  %v52 = vunpack.c.l.b16 %v29
  %v53 = vunpack.c.l.b16 %v30
  %v54 = vunpack.c.l.b16 %v31
  %v55 = vunpack.c.l.b16 %v32
  %v56 = vunpack.c.l.b16 %v33
  %v57 = vunpack.c.l.b16 %v34
  %v58 = vpack.c.b16 %v51, %v50
  %v59 = vpack.c.b16 %v53, %v52
  %v60 = vpack.c.b16 %v55, %v54
  %v61 = vpack.c.b16 %v57, %v56
  %vm66 = vcmask 523264
  %v68 = vsel %vm66, %v41, 0
  %70 = vmatprep.subr.bf16.mxu0 0
  %71 = vmatpush1.bf16.msra.mxu0 0
  %72 = vmatprep.subr.bf16.mxu0 0
  %73 = vmatpush1.bf16.msra.mxu0 0
  %74 = vmatprep.subr.bf16.mxu0 0
  %75 = vmatpush1.bf16.msra.mxu0 0
  %76 = vmatprep.subr.bf16.mxu0 0
  %77 = vmatpush1.bf16.msra.mxu0 0
  %78 = vmatprep.subr.bf16.mxu0 0
  %79 = vmatpush1.bf16.msra.mxu0 %v61
  %80 = vmatprep.subr.bf16.mxu0 0
  %81 = vmatpush1.bf16.msra.mxu0 %v60
  %82 = vmatprep.subr.bf16.mxu0 0
  %83 = vmatpush1.bf16.msra.mxu0 %v59
  %84 = vmatprep.subr.bf16.mxu0 0
  %85 = vmatpush1.bf16.msra.mxu0 %v58
  %86 = vmatprep.subr.bf16.mxu0 0
  %87 = vmatpush2.bf16.msra.mxu0 0
  %88 = vmatprep.subr.bf16.mxu0 0
  %89 = vmatpush2.bf16.msra.mxu0 0
  %90 = vmatprep.subr.bf16.mxu0 0
  %91 = vmatpush2.bf16.msra.mxu0 0
  %92 = vmatprep.subr.bf16.mxu0 0
  %93 = vmatpush2.bf16.msra.mxu0 0
  %94 = vmatprep.subr.bf16.mxu0 0
  %95 = vmatpush2.bf16.msra.mxu0 0
  %96 = vmatprep.subr.bf16.mxu0 0
  %97 = vmatpush2.bf16.msra.mxu0 0
  %98 = vmatprep.subr.bf16.mxu0 0
  %99 = vmatpush2.bf16.msra.mxu0 0
  %100 = vmatprep.subr.bf16.mxu0 0
  %101 = vmatpush2.bf16.msra.mxu0 0
  %102 = vmatprep.mubr.bf16.mxu0 0
  %103 = vmatmul.mubr.bf16.gmra.mxu0 %v68
  %v104 = vpop.f32.mrf.mxu0
  %v105 = vadd.f32 0.0, %v104
  %v106 = vpop.f32.mrf.mxu0
  %v107 = vpop.f32.mrf.mxu0
  %v108 = vadd.f32 0.0, %v107
  %v109 = vpop.f32.mrf.mxu0
  %110 = vdwg.mxu0
  %v111 = vadd.f32 %v35, %v105
  %v112 = vadd.f32 %v36, %v108
  %vm113 = vcmask 261120
  %114 = vst.msk [vmem:[%s4] sm:$0xff] %vm113, %v111
  %115 = vst.msk [vmem:[%s4 + $0x8] sm:$0xff] %vm113, %v112
  // Predicated region
  $region22: #{vit_forward.13} parent=0 // pred_check
    %p116 = pneg %p18
  $region23: #{vit_forward.13} parent=0 // pred_check_branch
    %118 = sbr.rel (%p116) target = $region25
  $region24: #{vit_forward.13} parent=0 // pred_region
    %v119 = vld [vmem:[%s4] sm:$0xff]
    %v120 = vld [vmem:[%s4 + $0x8] sm:$0xff]
    %v121 = vld [vmem:[%s2] sm:$0x1]
    %v123 = vlaneseq
    %v124 = vshrl.u32 %v123, 7
    %v125 = vsub.s32 0, %v124
    %v126 = vrot.slane %v121, %v125
    %v128 = vadd.f32 %v119, %v126
    %v129 = vadd.f32 %v120, %v126
    %v130 = vld [vmem:[%s3] sm:$0xff]
    %v131 = vld [vmem:[%s3 + $0x8] sm:$0xff]
    %v132 = vadd.f32 %v128, %v130
    %v133 = vadd.f32 %v129, %v131
    %134 = vst.msk [vmem:[%s4] sm:$0xff] %vm113, %v132
    %135 = vst.msk [vmem:[%s4 + $0x8] sm:$0xff] %vm113, %v133
  $region25: #{vit_forward.13} parent=0 // pred_fallthru
    _
  // Predicated region
  $region26: #{vit_forward.13} parent=0 // pred_check
    _
  $region27: #{vit_forward.13} parent=0 // pred_check_branch
    %137 = sbr.rel (0) target = $region29
  $region28: #{vit_forward.13} parent=0 // pred_region
    _
  $region29: #{vit_forward.13} parent=0 // pred_fallthru
    _
  // Predicated region
  $region30: #{vit_forward.13} parent=0 // pred_check
    _
  $region31: #{vit_forward.13} parent=0 // pred_check_branch
    %139 = sbr.rel (0) target = $region33
  $region32: #{vit_forward.13} parent=0 // pred_region
    _
  $region33: #{vit_forward.13} parent=0 // pred_fallthru
    _

</llo_original>
